<compile_context>
chip_gen: v5e
topology: v5e:2x2
jax: 0.10.0
libtpu: 0.0.40
codegen_flags: <defaults>
</compile_context>

<pallas_src>
import jax
import jax.numpy as jnp
from jax.experimental import pallas as pl
from jax.experimental.pallas import tpu as pltpu


def _truncated_dft_matrices(H, W, modes_x, modes_y, dtype=jnp.float32):
    """Real matrices implementing the truncated rfft2 / irfft2 pair.

    F: (H*W, M), M = modes_x*modes_y*2.  x.reshape(-1, H*W) @ F gives the kept
       low modes of rfft2(x, norm='forward') as interleaved (real, imag)
       pairs, mode-major index (kx*modes_y + ky)*2 + q.
    G: (M, H*W).  modes @ G reproduces irfft2(out_ft, s=(H, W),
       norm='forward') of a spectrum that is zero outside the kept block,
       matching the c2r convention (imag of the ky=0 / Nyquist column is
       ignored; off-DC columns carry the Hermitian factor 2).
    """
    h = jnp.arange(H, dtype=dtype)
    w = jnp.arange(W, dtype=dtype)
    kx = jnp.arange(modes_x, dtype=dtype)
    ky = jnp.arange(modes_y, dtype=dtype)
    # theta[h, w, kx, ky] = 2*pi*(kx*h/H + ky*w/W)
    theta = 2.0 * jnp.pi * (
        h[:, None, None, None] * kx[None, None, :, None] / H
        + w[None, :, None, None] * ky[None, None, None, :] / W)
    cos_t = jnp.cos(theta)
    sin_t = jnp.sin(theta)

    M = modes_x * modes_y * 2
    # Forward: Zr = (1/HW) sum x*cos(theta), Zi = -(1/HW) sum x*sin(theta).
    F = jnp.stack([cos_t, -sin_t], axis=-1).reshape(H * W, M) / float(H * W)

    # Inverse: y[h,w] = sum_{kx,ky} c_ky * (Zr*cos(theta) - Zi*sin(theta)),
    # c_ky = 1 for the DC (and Nyquist, if kept) column, else 2.
    herm = jnp.full((modes_y,), 2.0, dtype=dtype)
    herm = herm.at[0].set(1.0)
    if W % 2 == 0 and modes_y > W // 2:
        herm = herm.at[W // 2].set(1.0)
    G = jnp.stack([cos_t * herm, -sin_t * herm], axis=-1)   # (H, W, mx, my, 2)
    G = G.transpose(2, 3, 4, 0, 1).reshape(M, H * W)
    return F.astype(dtype), G.astype(dtype)


def spectralizer_kernel(x_ref, f_ref, w_ref, g_ref, o_ref, xm_ref):
    """Fused truncated-DFT -> per-mode channel mix -> inverse DFT (one batch).

    x_ref : (C_in, H*W)        spatial input, this batch element
    f_ref : (H*W, Mp)          forward truncated DFT matrix (lane padded)
    w_ref : (C_in, C_out, Mp)  per-mode mixing weights (lane padded)
    g_ref : (Mp, H*W)          inverse truncated DFT matrix (zero pad rows)
    o_ref : (C_out, H*W)       spatial output, this batch element
    xm_ref: (C_in, Mp)         VMEM scratch for the low-mode spectrum
    """
    # Truncated rfft2 as a single MXU matmul: (C_in, H*W) @ (H*W, Mp).
    xm_ref[...] = jnp.dot(x_ref[...], f_ref[...],
                          preferred_element_type=jnp.float32,
                          precision=jax.lax.Precision.HIGHEST)

    # Per-mode channel mix (einsum 'bixyq,ioxyq->boxyq' for this b): VPU
    # multiply-accumulate over the small static C_in axis, fully unrolled.
    # Accumulator is initialised from the i = 0 term (no zeros pass).
    # TODO(synk): for large C_in, chunk this loop (bounded unroll) and tile
    # the mode axis via the grid so the live set stays within the vreg file.
    c_in = x_ref.shape[0]
    mixed = xm_ref[pl.ds(0, 1), :] * w_ref[0]            # (C_out, Mp)
    for i in range(1, c_in):
        mixed = mixed + xm_ref[pl.ds(i, 1), :] * w_ref[i]

    # Truncated irfft2 as a single MXU matmul: (C_out, Mp) @ (Mp, H*W).
    o_ref[...] = jnp.dot(mixed, g_ref[...],
                         preferred_element_type=jnp.float32,
                         precision=jax.lax.Precision.HIGHEST)


def spectralizer_forward(x, weights, modes_x, modes_y):
    """Reproduces Spectralizer.forward.

    x:       (B, C_in, H, W) float32 (NCHW, as in PyTorch)
    weights: (C_in, C_out, modes_x, modes_y, 2) float32
    returns: (B, C_out, H, W) float32
    """
    B, c_in, H, W = x.shape
    c_out = weights.shape[1]
    HW = H * W
    M = modes_x * modes_y * 2
    Mp = ((M + 127) // 128) * 128               # lane-dense mode axis

    F, G = _truncated_dft_matrices(H, W, modes_x, modes_y)
    wr = weights.reshape(c_in, c_out, M)
    if Mp != M:
        F = jnp.pad(F, ((0, 0), (0, Mp - M)))
        G = jnp.pad(G, ((0, Mp - M), (0, 0)))
        wr = jnp.pad(wr, ((0, 0), (0, 0), (0, Mp - M)))

    x3 = x.reshape(B, c_in, HW)                 # natural layout, no transpose

    y3 = pl.pallas_call(
        spectralizer_kernel,
        out_shape=jax.ShapeDtypeStruct((B, c_out, HW), jnp.float32),
        grid=(B,),
        in_specs=[
            pl.BlockSpec((None, c_in, HW), lambda b: (b, 0, 0)),
            pl.BlockSpec((HW, Mp), lambda b: (0, 0)),          # resident
            pl.BlockSpec((c_in, c_out, Mp), lambda b: (0, 0, 0)),  # resident
            pl.BlockSpec((Mp, HW), lambda b: (0, 0)),          # resident
        ],
        out_specs=pl.BlockSpec((None, c_out, HW), lambda b: (b, 0, 0)),
        scratch_shapes=[pltpu.VMEM((c_in, Mp), jnp.float32)],
        compiler_params=pltpu.CompilerParams(
            dimension_semantics=("parallel",),  # shard batch across v7x's 2 TCs
            vmem_limit_bytes=32 * 1024 * 1024,
        ),
    )(x3, F, wr, G)

    return y3.reshape(B, c_out, H, W)


if __name__ == "__main__":
    # Small shapes consistent with the module.
    B, Cin, Cout = 2, 4, 4
    H, W = 16, 16
    modes_x, modes_y = 8, 5                     # modes_y <= W//2 + 1 = 9

    key = jax.random.PRNGKey(0)
    kx_key, kw_key = jax.random.split(key)

    x = jax.random.normal(kx_key, (B, Cin, H, W), dtype=jnp.float32)

    # Parameter init mirroring the PyTorch __init__:
    # scale * randn(in, out, mx, my, 2), scale = 1/(in*out)
    scale = 1.0 / (Cin * Cout)
    weights = scale * jax.random.normal(
        kw_key, (Cin, Cout, modes_x, modes_y, 2), dtype=jnp.float32)

    y = spectralizer_forward(x, weights, modes_x, modes_y)
    y = jax.block_until_ready(y)
    assert y.shape == (B, Cout, H, W)

    # Reference mirroring the PyTorch forward (rfft2 -> mode-truncated mix ->
    # zero-embedded spectrum -> irfft2, norm='forward' everywhere).
    x_ft = jnp.fft.rfft2(x, norm="forward")
    x_low = x_ft[:, :, :modes_x, :modes_y]
    x_ri = jnp.stack([x_low.real, x_low.imag], axis=-1).astype(jnp.float32)
    ref_low = jnp.einsum("bixyq,ioxyq->boxyq", x_ri, weights)
    out_ft = jnp.zeros((B, Cout, H, W // 2 + 1), jnp.complex64)
    out_ft = out_ft.at[:, :, :modes_x, :modes_y].set(
        ref_low[..., 0] + 1j * ref_low[..., 1])
    y_ref = jnp.fft.irfft2(out_ft, s=(H, W), norm="forward")

    max_err = float(jnp.max(jnp.abs(y - y_ref)))
    assert jnp.allclose(y, y_ref, atol=1e-3, rtol=1e-3), max_err

    print("KERNEL_OK")
</pallas_src>

<mosaic_0001>
module attributes {stable_mosaic.version = 11 : i64} {
  func.func @spectralizer_kernel(%arg0: i32, %arg1: memref<1x4x256xf32, #tpu.memory_space<vmem>>, %arg2: memref<256x128xf32, #tpu.memory_space<vmem>>, %arg3: memref<4x4x128xf32, #tpu.memory_space<vmem>>, %arg4: memref<128x256xf32, #tpu.memory_space<vmem>>, %arg5: memref<1x4x256xf32, #tpu.memory_space<vmem>>, %arg6: memref<4x128xf32, #tpu.memory_space<vmem>>) attributes {dimension_semantics = [#tpu.dimension_semantics<parallel>], iteration_bounds = array<i64: 2>, scalar_prefetch = 0 : i64, scratch_operands = 1 : i64, tpu.core_type = #tpu.core_type<tc>, window_params = [{transform_indices = @transform_0, window_bounds = array<i64: 1, 4, 256>}, {pipeline_mode = #tpu.pipeline_mode<synchronous>, transform_indices = @transform_1, window_bounds = array<i64: 256, 128>}, {pipeline_mode = #tpu.pipeline_mode<synchronous>, transform_indices = @transform_2, window_bounds = array<i64: 4, 4, 128>}, {pipeline_mode = #tpu.pipeline_mode<synchronous>, transform_indices = @transform_3, window_bounds = array<i64: 128, 256>}, {transform_indices = @transform_4, window_bounds = array<i64: 1, 4, 256>}]} {
    %c0 = arith.constant 0 : index
    %c0_0 = arith.constant 0 : index
    %c0_1 = arith.constant 0 : index
    %0 = vector.load %arg1[%c0, %c0_0, %c0_1] : memref<1x4x256xf32, #tpu.memory_space<vmem>>, vector<1x4x256xf32>
    %1 = vector.shape_cast %0 : vector<1x4x256xf32> to vector<4x256xf32>
    %c0_2 = arith.constant 0 : index
    %c0_3 = arith.constant 0 : index
    %2 = vector.load %arg2[%c0_2, %c0_3] : memref<256x128xf32, #tpu.memory_space<vmem>>, vector<256x128xf32>
    %cst = arith.constant dense<0.000000e+00> : vector<4x128xf32>
    %3 = tpu.matmul %1, %2, %cst {dimension_numbers = #tpu.dot_dimension_numbers<[1], [0], [0], [1], [0, 0, 1, 1], [], []>, precision = #tpu.contract_precision<fp32>} : vector<4x256xf32>, vector<256x128xf32>, vector<4x128xf32> -> vector<4x128xf32>
    %c0_4 = arith.constant 0 : index
    %c0_5 = arith.constant 0 : index
    %4 = vector.load %arg6[%c0_4, %c0_5] : memref<4x128xf32, #tpu.memory_space<vmem>>, vector<4x128xf32>
    tpu.vector_store %arg6[%c0_4, %c0_5], %3 {strides = array<i32>} : memref<4x128xf32, #tpu.memory_space<vmem>>, vector<4x128xf32>,
    %c0_6 = arith.constant 0 : index
    %c0_7 = arith.constant 0 : index
    %5 = vector.load %arg6[%c0_6, %c0_7] : memref<4x128xf32, #tpu.memory_space<vmem>>, vector<1x128xf32>
    %c0_8 = arith.constant 0 : index
    %c0_9 = arith.constant 0 : index
    %c0_10 = arith.constant 0 : index
    %6 = vector.load %arg3[%c0_8, %c0_9, %c0_10] : memref<4x4x128xf32, #tpu.memory_space<vmem>>, vector<1x4x128xf32>
    %7 = vector.shape_cast %6 : vector<1x4x128xf32> to vector<4x128xf32>
    %8 = vector.broadcast %5 : vector<1x128xf32> to vector<4x128xf32>
    %9 = arith.mulf %8, %7 : vector<4x128xf32>
    %c1 = arith.constant 1 : index
    %c0_11 = arith.constant 0 : index
    %10 = vector.load %arg6[%c1, %c0_11] : memref<4x128xf32, #tpu.memory_space<vmem>>, vector<1x128xf32>
    %c1_12 = arith.constant 1 : index
    %c0_13 = arith.constant 0 : index
    %c0_14 = arith.constant 0 : index
    %11 = vector.load %arg3[%c1_12, %c0_13, %c0_14] : memref<4x4x128xf32, #tpu.memory_space<vmem>>, vector<1x4x128xf32>
    %12 = vector.shape_cast %11 : vector<1x4x128xf32> to vector<4x128xf32>
    %13 = vector.broadcast %10 : vector<1x128xf32> to vector<4x128xf32>
    %14 = arith.mulf %13, %12 : vector<4x128xf32>
    %15 = arith.addf %9, %14 : vector<4x128xf32>
    %c2 = arith.constant 2 : index
    %c0_15 = arith.constant 0 : index
    %16 = vector.load %arg6[%c2, %c0_15] : memref<4x128xf32, #tpu.memory_space<vmem>>, vector<1x128xf32>
    %c2_16 = arith.constant 2 : index
    %c0_17 = arith.constant 0 : index
    %c0_18 = arith.constant 0 : index
    %17 = vector.load %arg3[%c2_16, %c0_17, %c0_18] : memref<4x4x128xf32, #tpu.memory_space<vmem>>, vector<1x4x128xf32>
    %18 = vector.shape_cast %17 : vector<1x4x128xf32> to vector<4x128xf32>
    %19 = vector.broadcast %16 : vector<1x128xf32> to vector<4x128xf32>
    %20 = arith.mulf %19, %18 : vector<4x128xf32>
    %21 = arith.addf %15, %20 : vector<4x128xf32>
    %c3 = arith.constant 3 : index
    %c0_19 = arith.constant 0 : index
    %22 = vector.load %arg6[%c3, %c0_19] : memref<4x128xf32, #tpu.memory_space<vmem>>, vector<1x128xf32>
    %c3_20 = arith.constant 3 : index
    %c0_21 = arith.constant 0 : index
    %c0_22 = arith.constant 0 : index
    %23 = vector.load %arg3[%c3_20, %c0_21, %c0_22] : memref<4x4x128xf32, #tpu.memory_space<vmem>>, vector<1x4x128xf32>
    %24 = vector.shape_cast %23 : vector<1x4x128xf32> to vector<4x128xf32>
    %25 = vector.broadcast %22 : vector<1x128xf32> to vector<4x128xf32>
    %26 = arith.mulf %25, %24 : vector<4x128xf32>
    %27 = arith.addf %21, %26 : vector<4x128xf32>
    %c0_23 = arith.constant 0 : index
    %c0_24 = arith.constant 0 : index
    %28 = vector.load %arg4[%c0_23, %c0_24] : memref<128x256xf32, #tpu.memory_space<vmem>>, vector<128x256xf32>
    %cst_25 = arith.constant dense<0.000000e+00> : vector<4x256xf32>
    %29 = tpu.matmul %27, %28, %cst_25 {dimension_numbers = #tpu.dot_dimension_numbers<[1], [0], [0], [1], [0, 0, 1, 1], [], []>, precision = #tpu.contract_precision<fp32>} : vector<4x128xf32>, vector<128x256xf32>, vector<4x256xf32> -> vector<4x256xf32>
    %c0_26 = arith.constant 0 : index
    %c0_27 = arith.constant 0 : index
    %c0_28 = arith.constant 0 : index
    %30 = vector.load %arg5[%c0_26, %c0_27, %c0_28] : memref<1x4x256xf32, #tpu.memory_space<vmem>>, vector<1x4x256xf32>
    %31 = vector.shape_cast %30 : vector<1x4x256xf32> to vector<4x256xf32>
    %32 = vector.shape_cast %29 : vector<4x256xf32> to vector<1x4x256xf32>
    tpu.vector_store %arg5[%c0_26, %c0_27, %c0_28], %32 {strides = array<i32>} : memref<1x4x256xf32, #tpu.memory_space<vmem>>, vector<1x4x256xf32>,
    return
  }
  func.func @transform_0(%arg0: i32) -> (i32, i32, i32) {
    %c0_i32 = arith.constant 0 : i32
    %c0_i32_0 = arith.constant 0 : i32
    %c0_i32_1 = arith.constant 0 : i32
    return %arg0, %c0_i32, %c0_i32_0 : i32, i32, i32
  }
  func.func @transform_1(%arg0: i32) -> (i32, i32) {
    %c0_i32 = arith.constant 0 : i32
    %c0_i32_0 = arith.constant 0 : i32
    %c0_i32_1 = arith.constant 0 : i32
    return %c0_i32, %c0_i32_0 : i32, i32
  }
  func.func @transform_2(%arg0: i32) -> (i32, i32, i32) {
    %c0_i32 = arith.constant 0 : i32
    %c0_i32_0 = arith.constant 0 : i32
    %c0_i32_1 = arith.constant 0 : i32
    %c0_i32_2 = arith.constant 0 : i32
    return %c0_i32, %c0_i32_0, %c0_i32_1 : i32, i32, i32
  }
  func.func @transform_3(%arg0: i32) -> (i32, i32) {
    %c0_i32 = arith.constant 0 : i32
    %c0_i32_0 = arith.constant 0 : i32
    %c0_i32_1 = arith.constant 0 : i32
    return %c0_i32, %c0_i32_0 : i32, i32
  }
  func.func @transform_4(%arg0: i32) -> (i32, i32, i32) {
    %c0_i32 = arith.constant 0 : i32
    %c0_i32_0 = arith.constant 0 : i32
    %c0_i32_1 = arith.constant 0 : i32
    return %arg0, %c0_i32, %c0_i32_0 : i32, i32, i32
  }
}

</mosaic_0001>

<llo_original>
// kernel: tpu_custom_call.1
$region0: #{tpu_custom_call.1}
  #allocation0 [shape = 'u32[]', space=smem, size = 0x4, offset = 0x4, fixed_abs, tag = 'smem constant byte address 0x4 - core index']
  #allocation1 [shape = 'u32[72,128]{1,0:T(1,128)}', space=vmem, size = 0x9000, scoped, tag = 'internal scratch']
  #allocation2 [shape = 'f32[4,128]{1,0:T(4,128)}', space=vmem, size = 0x800, scoped, tag = 'scratch operand']
  %s0 = inlined_call_operand.hbm [shape: f32[2,4,256], index: 0, kind: input, shape index: {}]
  %s1 = inlined_call_operand.hbm [shape: f32[256,128], index: 1, kind: input, shape index: {}]
  %s2 = inlined_call_operand.hbm [shape: f32[4,4,128], index: 2, kind: input, shape index: {}]
  %s3 = inlined_call_operand.hbm [shape: f32[128,256], index: 3, kind: input, shape index: {}]
  %s4 = inlined_call_operand.hbm [shape: f32[2,4,256], index: 4, kind: output, shape index: {}]
  %s5 = sld [smem:[#allocation0]]
  $region65: #{tpu_custom_call.1} parent=0
    _
  %s7 = ssub.s32 1, %s5
  %s8 = scalar_select 0, %s7, %s5
  $region1: #{tpu_custom_call.1} parent=0
    #allocation3 [shape = 'u8[8192]{0}', space=vmem, size = 0x2000, scoped, tag = 'input window, operand 0']
    #allocation4 [shape = 's32[2]{0}', space=sflag, size = 0x8, scoped, tag = 'scoped memory for tpu_custom_call.1']
    #allocation5 [shape = 's32[2]{0}', space=sflag, size = 0x8, scoped, tag = 'scoped memory for tpu_custom_call.1']
    #allocation6 [shape = 'u8[131072]{0}', space=vmem, size = 0x20000, scoped, tag = 'input window, operand 1, single buffered']
    #allocation7 [shape = 's32[1]{0}', space=sflag, size = 0x4, scoped, tag = 'scoped memory for tpu_custom_call.1']
    #allocation8 [shape = 'u8[8192]{0}', space=vmem, size = 0x2000, scoped, tag = 'input window, operand 2, single buffered']
    #allocation9 [shape = 'u8[131072]{0}', space=vmem, size = 0x20000, scoped, tag = 'input window, operand 3, single buffered']
    #allocation10 [shape = 's32[1]{0}', space=sflag, size = 0x4, scoped, tag = 'scoped memory for tpu_custom_call.1']
    #allocation11 [shape = 'u8[8192]{0}', space=vmem, size = 0x2000, scoped, tag = 'output window, operand 0']
    %9 = vsyncpa [#allocation4], 0
    %s10 = scalar_lea.sflag [#allocation4], 1
    %11 = vsyncpa %s10, 0
    %12 = vsyncpa [#allocation7], 0
    %13 = vsyncpa [#allocation10], 0
    %14 = vsyncpa [#allocation5], 0
    %s15 = scalar_lea.sflag [#allocation5], 1
    %16 = vsyncpa %s15, 0
    loop: start=0, step=1, limit=4
    $region2: #{tpu_custom_call.1} parent=1 // loop_pre_header
      _
    $region3: #{tpu_custom_call.1} parent=1 // loop_header
      %s18 = sphi 0, %s22
      %p19 = scmp.ge.s32.totalorder %s18, 4
      %s28 = sphi 0, %s30
      %s31 = sphi 0, %s28
      %s32 = sphi 0, %s31
      %s48 = sphi 0, %s32
      %s52 = sphi 0, %s52
      %s54 = sphi 0, %s52
      %s55 = sphi 0, %s54
      %s69 = sphi 0, %s55
      %s73 = sphi 0, %s73
      %s75 = sphi 0, %s73
      %s76 = sphi 0, %s75
      %s90 = sphi 0, %s76
      %s94 = sphi 0, %s94
      %s96 = sphi 0, %s94
      %s97 = sphi 0, %s96
      %s111 = sphi 0, %s97
      %s117 = sphi 0, %s119
      %s120 = sphi 0, %s117
      %s121 = sphi 0, %s120
      %s137 = sphi 0, %s121
    $region4: #{tpu_custom_call.1} parent=1 // loop_header_branch
      %21 = sbr.rel (%p19) target = $region8
    $region5: #{tpu_custom_call.1} parent=1 // loop_body
      %s23 = ssub.s32 %s18, 1
      %s24 = ssub.s32 %s18, 2
      %s25 = sadd.s32 %s18, 1
      %s26 = ssub.s32 %s18, %s25
      %p27 = scmp.eq.s32.totalorder %s26, 0
      %s29 = sadd.s32 %s28, 1
      %s30 = scalar_select %p27, %s28, %s29
      %p33 = pneg %p27
      %p34 = scmp.eq.s32.totalorder %s18, 1
      %p35 = por %p33, %p34
      %p36 = scmp.ne.s32.totalorder %s28, %s31
      %p37 = scmp.eq.s32.totalorder %s18, 0
      %p38 = por %p36, %p37
      %p39 = scmp.ne.s32.totalorder %s28, %s31
      %p40 = scmp.eq.s32.totalorder %s23, 1
      %p41 = por %p39, %p40
      %p42 = scmp.ne.s32.totalorder %s31, %s32
      %p43 = scmp.eq.s32.totalorder %s23, 0
      %p44 = por %p42, %p43
      %p45 = scmp.ne.s32.totalorder %s31, %s32
      %p46 = scmp.eq.s32.totalorder %s24, 1
      %p47 = por %p45, %p46
      %p49 = scmp.ne.s32.totalorder %s32, %s48
      %p50 = scmp.eq.s32.totalorder %s24, 0
      %p51 = por %p49, %p50
      %s53 = sadd.s32 %s52, 1
      %p56 = scmp.eq.s32.totalorder %s18, 1
      %p57 = scmp.ne.s32.totalorder %s52, %s54
      %p58 = scmp.eq.s32.totalorder %s18, 0
      %p59 = por %p57, %p58
      %p60 = scmp.ne.s32.totalorder %s52, %s54
      %p61 = scmp.eq.s32.totalorder %s23, 1
      %p62 = por %p60, %p61
      %p63 = scmp.ne.s32.totalorder %s54, %s55
      %p64 = scmp.eq.s32.totalorder %s23, 0
      %p65 = por %p63, %p64
      %p66 = scmp.ne.s32.totalorder %s54, %s55
      %p67 = scmp.eq.s32.totalorder %s24, 1
      %p68 = por %p66, %p67
      %p70 = scmp.ne.s32.totalorder %s55, %s69
      %p71 = scmp.eq.s32.totalorder %s24, 0
      %p72 = por %p70, %p71
      %s74 = sadd.s32 %s73, 1
      %p77 = scmp.eq.s32.totalorder %s18, 1
      %p78 = scmp.ne.s32.totalorder %s73, %s75
      %p79 = scmp.eq.s32.totalorder %s18, 0
      %p80 = por %p78, %p79
      %p81 = scmp.ne.s32.totalorder %s73, %s75
      %p82 = scmp.eq.s32.totalorder %s23, 1
      %p83 = por %p81, %p82
      %p84 = scmp.ne.s32.totalorder %s75, %s76
      %p85 = scmp.eq.s32.totalorder %s23, 0
      %p86 = por %p84, %p85
      %p87 = scmp.ne.s32.totalorder %s75, %s76
      %p88 = scmp.eq.s32.totalorder %s24, 1
      %p89 = por %p87, %p88
      %p91 = scmp.ne.s32.totalorder %s76, %s90
      %p92 = scmp.eq.s32.totalorder %s24, 0
      %p93 = por %p91, %p92
      %s95 = sadd.s32 %s94, 1
      %p98 = scmp.eq.s32.totalorder %s18, 1
      %p99 = scmp.ne.s32.totalorder %s94, %s96
      %p100 = scmp.eq.s32.totalorder %s18, 0
      %p101 = por %p99, %p100
      %p102 = scmp.ne.s32.totalorder %s94, %s96
      %p103 = scmp.eq.s32.totalorder %s23, 1
      %p104 = por %p102, %p103
      %p105 = scmp.ne.s32.totalorder %s96, %s97
      %p106 = scmp.eq.s32.totalorder %s23, 0
      %p107 = por %p105, %p106
      %p108 = scmp.ne.s32.totalorder %s96, %s97
      %p109 = scmp.eq.s32.totalorder %s24, 1
      %p110 = por %p108, %p109
      %p112 = scmp.ne.s32.totalorder %s97, %s111
      %p113 = scmp.eq.s32.totalorder %s24, 0
      %p114 = por %p112, %p113
      %s115 = ssub.s32 %s18, %s25
      %p116 = scmp.eq.s32.totalorder %s115, 0
      %s118 = sadd.s32 %s117, 1
      %s119 = scalar_select %p116, %s117, %s118
      %p122 = pneg %p116
      %p123 = scmp.eq.s32.totalorder %s18, 1
      %p124 = por %p122, %p123
      %p125 = scmp.ne.s32.totalorder %s117, %s120
      %p126 = scmp.eq.s32.totalorder %s18, 0
      %p127 = por %p125, %p126
      %p128 = scmp.ne.s32.totalorder %s117, %s120
      %p129 = scmp.eq.s32.totalorder %s23, 1
      %p130 = por %p128, %p129
      %p131 = scmp.ne.s32.totalorder %s120, %s121
      %p132 = scmp.eq.s32.totalorder %s23, 0
      %p133 = por %p131, %p132
      %p134 = scmp.ne.s32.totalorder %s120, %s121
      %p135 = scmp.eq.s32.totalorder %s24, 1
      %p136 = por %p134, %p135
      %p138 = scmp.ne.s32.totalorder %s121, %s137
      %p139 = scmp.eq.s32.totalorder %s24, 0
      %p140 = por %p138, %p139
      %p141 = scmp.le.s32.totalorder 1, %s18
      %p142 = scmp.lt.s32.totalorder %s18, 3
      %p143 = pnand %p141, %p142
      %p144 = pneg %p143
      // Predicated region
      $region9: #{tpu_custom_call.1} parent=5 // pred_check
        _
      $region10: #{tpu_custom_call.1} parent=5 // pred_check_branch
        %146 = sbr.rel (%p143) target = $region12
      $region11: #{tpu_custom_call.1} parent=5 // pred_region
        %s147 = ssub.s32 %s18, 1
        // Predicated region
        $region13: #{tpu_custom_call.1} parent=11 // pred_check
          %p148 = pneg %p65
        $region14: #{tpu_custom_call.1} parent=11 // pred_check_branch
          %150 = sbr.rel (%p148) target = $region16
        $region15: #{tpu_custom_call.1} parent=11 // pred_region
          %152 = vsyncadd [#allocation7], 0
          %s153 = sshll.u32 %s1, 4
          %s154 = int_to_ptr.hbm [resolvable:$true] %s153
          %s155 = sshll.u32 [#allocation6], 4
          %s156 = int_to_ptr.vmem [resolvable:$true] %s155
          %161 = dma.hbm_to_vmem [thread:$0]  %s154, 4096, %s156, [#allocation7], 128, 128, 8
        $region16: #{tpu_custom_call.1} parent=11 // pred_fallthru
          _
        // Predicated region
        $region17: #{tpu_custom_call.1} parent=11 // pred_check
          %p162 = pneg %p86
        $region18: #{tpu_custom_call.1} parent=11 // pred_check_branch
          %164 = sbr.rel (%p162) target = $region20
        $region19: #{tpu_custom_call.1} parent=11 // pred_region
          %166 = vsyncadd [#allocation7], 0
          %s167 = sshll.u32 %s2, 4
          %s168 = int_to_ptr.hbm [resolvable:$true] %s167
          %s169 = sshll.u32 [#allocation8], 4
          %s170 = int_to_ptr.vmem [resolvable:$true] %s169
          %175 = dma.hbm_to_vmem [thread:$0]  %s168, 256, %s170, [#allocation7], 64, 64, 4
        $region20: #{tpu_custom_call.1} parent=11 // pred_fallthru
          _
        // Predicated region
        $region21: #{tpu_custom_call.1} parent=11 // pred_check
          %p176 = pneg %p107
        $region22: #{tpu_custom_call.1} parent=11 // pred_check_branch
          %178 = sbr.rel (%p176) target = $region24
        $region23: #{tpu_custom_call.1} parent=11 // pred_region
          %180 = vsyncadd [#allocation10], 0
          %s181 = sshll.u32 %s3, 4
          %s182 = int_to_ptr.hbm [resolvable:$true] %s181
          %s183 = sshll.u32 [#allocation9], 4
          %s184 = int_to_ptr.vmem [resolvable:$true] %s183
          %189 = dma.hbm_to_vmem [thread:$0]  %s182, 4096, %s184, [#allocation10], 256, 256, 16
        $region24: #{tpu_custom_call.1} parent=11 // pred_fallthru
          _
      $region12: #{tpu_custom_call.1} parent=5 // pred_fallthru
        _
      %p190 = scmp.lt.s32.totalorder %s18, 2
      // Predicated region
      $region25: #{tpu_custom_call.1} parent=5 // pred_check
        %p191 = pneg %p190
      $region26: #{tpu_custom_call.1} parent=5 // pred_check_branch
        %193 = sbr.rel (%p191) target = $region28
      $region27: #{tpu_custom_call.1} parent=5 // pred_region
        // Predicated region
        $region29: #{tpu_custom_call.1} parent=27 // pred_check
          %p194 = pneg %p38
        $region30: #{tpu_custom_call.1} parent=27 // pred_check_branch
          %196 = sbr.rel (%p194) target = $region32
        $region31: #{tpu_custom_call.1} parent=27 // pred_region
          %s197 = sand.u32 %s28, 1
          %s198 = scalar_lea.sflag [#allocation4], %s197
          %s199 = sand.u32 %s28, 1
          %s200 = smul.addr %s199, 8
          %s201 = scalar_lea.vmem [#allocation3], %s200
          %203 = vsyncadd %s198, 0
          %s204 = smul.addr %s18, 2
          %s205 = smul.addr %s204, 4
          %s206 = scalar_lea.hbm %s0, %s205
          %s208 = sshll.u32 %s206, 4
          %s209 = int_to_ptr.hbm [resolvable:$true] %s208
          %s210 = sshll.u32 %s201, 4
          %s211 = int_to_ptr.vmem [resolvable:$true] %s210
          %213 = dma.hbm_to_vmem [thread:$0]  %s209, 128, %s211, %s198
        $region32: #{tpu_custom_call.1} parent=27 // pred_fallthru
          _
      $region28: #{tpu_custom_call.1} parent=5 // pred_fallthru
        _
      %p214 = scmp.le.s32.totalorder 1, %s18
      %p215 = scmp.lt.s32.totalorder %s18, 3
      %p216 = pnand %p214, %p215
      %p217 = pneg %p216
      // Predicated region
      $region33: #{tpu_custom_call.1} parent=5 // pred_check
        _
      $region34: #{tpu_custom_call.1} parent=5 // pred_check_branch
        %219 = sbr.rel (%p216) target = $region36
      $region35: #{tpu_custom_call.1} parent=5 // pred_region
        %s220 = ssub.s32 %s18, 1
        %s221 = sand.u32 %s31, 1
        %s222 = scalar_lea.sflag [#allocation4], %s221
        %s223 = sand.u32 %s31, 1
        %s224 = smul.addr %s223, 8
        %s225 = scalar_lea.vmem [#allocation3], %s224
        // Predicated region
        $region37: #{tpu_custom_call.1} parent=35 // pred_check
          %p226 = pneg %p44
        $region38: #{tpu_custom_call.1} parent=35 // pred_check_branch
          %228 = sbr.rel (%p226) target = $region40
        $region39: #{tpu_custom_call.1} parent=35 // pred_region
          %230 = dma.done %s222, 128
        $region40: #{tpu_custom_call.1} parent=35 // pred_fallthru
          _
        // Predicated region
        $region41: #{tpu_custom_call.1} parent=35 // pred_check
          %p231 = pneg %p65
        $region42: #{tpu_custom_call.1} parent=35 // pred_check_branch
          %233 = sbr.rel (%p231) target = $region44
        $region43: #{tpu_custom_call.1} parent=35 // pred_region
          %235 = dma.done [#allocation7], 4096
        $region44: #{tpu_custom_call.1} parent=35 // pred_fallthru
          _
        // Predicated region
        $region45: #{tpu_custom_call.1} parent=35 // pred_check
          %p236 = pneg %p86
        $region46: #{tpu_custom_call.1} parent=35 // pred_check_branch
          %238 = sbr.rel (%p236) target = $region48
        $region47: #{tpu_custom_call.1} parent=35 // pred_region
          %240 = dma.done [#allocation7], 256
        $region48: #{tpu_custom_call.1} parent=35 // pred_fallthru
          _
        // Predicated region
        $region49: #{tpu_custom_call.1} parent=35 // pred_check
          %p241 = pneg %p107
        $region50: #{tpu_custom_call.1} parent=35 // pred_check_branch
          %243 = sbr.rel (%p241) target = $region52
        $region51: #{tpu_custom_call.1} parent=35 // pred_region
          %245 = dma.done [#allocation10], 4096
        $region52: #{tpu_custom_call.1} parent=35 // pred_fallthru
          _
        %s246 = sand.u32 %s31, 1
        %s247 = scalar_lea.sflag [#allocation4], %s246
        %s248 = sand.u32 %s31, 1
        %s249 = smul.addr %s248, 8
        %s250 = scalar_lea.vmem [#allocation3], %s249
        %p251 = pneg %p44
        %p252 = pneg %p41
        %p253 = pneg %p65
        %p254 = pneg %p62
        %p255 = pneg %p86
        %p256 = pneg %p83
        %p257 = pneg %p107
        %p258 = pneg %p104
        %p259 = pneg %p133
        %p260 = pneg %p130
        %s261 = sand.u32 %s120, 1
        %s262 = scalar_lea.sflag [#allocation5], %s261
        %s263 = sand.u32 %s120, 1
        %s264 = smul.addr %s263, 8
        %s265 = scalar_lea.vmem [#allocation11], %s264
        %v266 = vld [vmem:[%s225] sm:$0xff]
        %v267 = vld [vmem:[#allocation6] sm:$0xff]
        %v268 = vld [vmem:[#allocation6 + $0x8] sm:$0xff]
        %v269 = vld [vmem:[#allocation6 + $0x10] sm:$0xff]
        %v270 = vld [vmem:[#allocation6 + $0x18] sm:$0xff]
        %v271 = vld [vmem:[#allocation6 + $0x20] sm:$0xff]
        %v272 = vld [vmem:[#allocation6 + $0x28] sm:$0xff]
        %v273 = vld [vmem:[#allocation6 + $0x30] sm:$0xff]
        %v274 = vld [vmem:[#allocation6 + $0x38] sm:$0xff]
        %v275 = vld [vmem:[#allocation6 + $0x40] sm:$0xff]
        %v276 = vld [vmem:[#allocation6 + $0x48] sm:$0xff]
        %v277 = vld [vmem:[#allocation6 + $0x50] sm:$0xff]
        %v278 = vld [vmem:[#allocation6 + $0x58] sm:$0xff]
        %v279 = vld [vmem:[#allocation6 + $0x60] sm:$0xff]
        %v280 = vld [vmem:[#allocation6 + $0x68] sm:$0xff]
        %v281 = vld [vmem:[#allocation6 + $0x70] sm:$0xff]
        %v282 = vld [vmem:[#allocation6 + $0x78] sm:$0xff]
        %v283 = vld [vmem:[#allocation6 + $0x80] sm:$0xff]
        %v284 = vld [vmem:[#allocation6 + $0x88] sm:$0xff]
        %v285 = vld [vmem:[#allocation6 + $0x90] sm:$0xff]
        %v286 = vld [vmem:[#allocation6 + $0x98] sm:$0xff]
        %v287 = vld [vmem:[#allocation6 + $0xa0] sm:$0xff]
        %v288 = vld [vmem:[#allocation6 + $0xa8] sm:$0xff]
        %v289 = vld [vmem:[#allocation6 + $0xb0] sm:$0xff]
        %v290 = vld [vmem:[#allocation6 + $0xb8] sm:$0xff]
        %v291 = vld [vmem:[#allocation6 + $0xc0] sm:$0xff]
        %v292 = vld [vmem:[#allocation6 + $0xc8] sm:$0xff]
        %v293 = vld [vmem:[#allocation6 + $0xd0] sm:$0xff]
        %v294 = vld [vmem:[#allocation6 + $0xd8] sm:$0xff]
        %v295 = vld [vmem:[#allocation6 + $0xe0] sm:$0xff]
        %v296 = vld [vmem:[#allocation6 + $0xe8] sm:$0xff]
        %v297 = vld [vmem:[#allocation6 + $0xf0] sm:$0xff]
        %v298 = vld [vmem:[#allocation6 + $0xf8] sm:$0xff]
        %300 = vst [vmem:[#allocation1] ss:$2 sm:$0xff] %v266
        %v301 = vld.sshfl [vmem:[#allocation1] sm:$0xff pattern:$0x75316420]
        %v302 = vld.sshfl [vmem:[#allocation1 + $0x8] sm:$0xff pattern:$0x75316420]
        %v305 = vand.u32 %v282, 4294901760
        %306 = vmatpush.msra.mxu0 %v305
        %v307 = vand.u32 %v281, 4294901760
        %308 = vmatpush.msra.mxu0 %v307
        %v309 = vand.u32 %v280, 4294901760
        %310 = vmatpush.msra.mxu0 %v309
        %v311 = vand.u32 %v279, 4294901760
        %312 = vmatpush.msra.mxu0 %v311
        %v313 = vand.u32 %v278, 4294901760
        %314 = vmatpush.msra.mxu0 %v313
        %v315 = vand.u32 %v277, 4294901760
        %316 = vmatpush.msra.mxu0 %v315
        %v317 = vand.u32 %v276, 4294901760
        %318 = vmatpush.msra.mxu0 %v317
        %v319 = vand.u32 %v275, 4294901760
        %320 = vmatpush.msra.mxu0 %v319
        %v321 = vand.u32 %v274, 4294901760
        %322 = vmatpush.msra.mxu0 %v321
        %v323 = vand.u32 %v273, 4294901760
        %324 = vmatpush.msra.mxu0 %v323
        %v325 = vand.u32 %v272, 4294901760
        %326 = vmatpush.msra.mxu0 %v325
        %v327 = vand.u32 %v271, 4294901760
        %328 = vmatpush.msra.mxu0 %v327
        %v329 = vand.u32 %v270, 4294901760
        %330 = vmatpush.msra.mxu0 %v329
        %v331 = vand.u32 %v269, 4294901760
        %332 = vmatpush.msra.mxu0 %v331
        %v333 = vand.u32 %v268, 4294901760
        %334 = vmatpush.msra.mxu0 %v333
        %v335 = vand.u32 %v267, 4294901760
        %336 = vmatpush.msra.mxu0 %v335
        %v337 = vand.u32 %v301, 4294901760
        %v338 = vsub.f32 %v301, %v337
        %v339 = vand.u32 %v338, 4294901760
        %v340 = vsub.f32 %v338, %v339
        %v341 = vand.u32 %v340, 4294901760
        %342 = vmatmul.f32.gmra.mxu0 %v341
        %v343 = vpop.f32.mrf.mxu0
        %v344 = vadd.f32 0.0, %v343
        %345 = vdwg.mxu0
        %v346 = vand.u32 %v282, 4294901760
        %v347 = vsub.f32 %v282, %v346
        %v348 = vand.u32 %v347, 4294901760
        %v349 = vsub.f32 %v347, %v348
        %v350 = vand.u32 %v349, 4294901760
        %351 = vmatpush.msra.mxu0 %v350
        %v352 = vand.u32 %v281, 4294901760
        %v353 = vsub.f32 %v281, %v352
        %v354 = vand.u32 %v353, 4294901760
        %v355 = vsub.f32 %v353, %v354
        %v356 = vand.u32 %v355, 4294901760
        %357 = vmatpush.msra.mxu0 %v356
        %v358 = vand.u32 %v280, 4294901760
        %v359 = vsub.f32 %v280, %v358
        %v360 = vand.u32 %v359, 4294901760
        %v361 = vsub.f32 %v359, %v360
        %v362 = vand.u32 %v361, 4294901760
        %363 = vmatpush.msra.mxu0 %v362
        %v364 = vand.u32 %v279, 4294901760
        %v365 = vsub.f32 %v279, %v364
        %v366 = vand.u32 %v365, 4294901760
        %v367 = vsub.f32 %v365, %v366
        %v368 = vand.u32 %v367, 4294901760
        %369 = vmatpush.msra.mxu0 %v368
        %v370 = vand.u32 %v278, 4294901760
        %v371 = vsub.f32 %v278, %v370
        %v372 = vand.u32 %v371, 4294901760
        %v373 = vsub.f32 %v371, %v372
        %v374 = vand.u32 %v373, 4294901760
        %375 = vmatpush.msra.mxu0 %v374
        %v376 = vand.u32 %v277, 4294901760
        %v377 = vsub.f32 %v277, %v376
        %v378 = vand.u32 %v377, 4294901760
        %v379 = vsub.f32 %v377, %v378
        %v380 = vand.u32 %v379, 4294901760
        %381 = vmatpush.msra.mxu0 %v380
        %v382 = vand.u32 %v276, 4294901760
        %v383 = vsub.f32 %v276, %v382
        %v384 = vand.u32 %v383, 4294901760
        %v385 = vsub.f32 %v383, %v384
        %v386 = vand.u32 %v385, 4294901760
        %387 = vmatpush.msra.mxu0 %v386
        %v388 = vand.u32 %v275, 4294901760
        %v389 = vsub.f32 %v275, %v388
        %v390 = vand.u32 %v389, 4294901760
        %v391 = vsub.f32 %v389, %v390
        %v392 = vand.u32 %v391, 4294901760
        %393 = vmatpush.msra.mxu0 %v392
        %v394 = vand.u32 %v274, 4294901760
        %v395 = vsub.f32 %v274, %v394
        %v396 = vand.u32 %v395, 4294901760
        %v397 = vsub.f32 %v395, %v396
        %v398 = vand.u32 %v397, 4294901760
        %399 = vmatpush.msra.mxu0 %v398
        %v400 = vand.u32 %v273, 4294901760
        %v401 = vsub.f32 %v273, %v400
        %v402 = vand.u32 %v401, 4294901760
        %v403 = vsub.f32 %v401, %v402
        %v404 = vand.u32 %v403, 4294901760
        %405 = vmatpush.msra.mxu0 %v404
        %v406 = vand.u32 %v272, 4294901760
        %v407 = vsub.f32 %v272, %v406
        %v408 = vand.u32 %v407, 4294901760
        %v409 = vsub.f32 %v407, %v408
        %v410 = vand.u32 %v409, 4294901760
        %411 = vmatpush.msra.mxu0 %v410
        %v412 = vand.u32 %v271, 4294901760
        %v413 = vsub.f32 %v271, %v412
        %v414 = vand.u32 %v413, 4294901760
        %v415 = vsub.f32 %v413, %v414
        %v416 = vand.u32 %v415, 4294901760
        %417 = vmatpush.msra.mxu0 %v416
        %v418 = vand.u32 %v270, 4294901760
        %v419 = vsub.f32 %v270, %v418
        %v420 = vand.u32 %v419, 4294901760
        %v421 = vsub.f32 %v419, %v420
        %v422 = vand.u32 %v421, 4294901760
        %423 = vmatpush.msra.mxu0 %v422
        %v424 = vand.u32 %v269, 4294901760
        %v425 = vsub.f32 %v269, %v424
        %v426 = vand.u32 %v425, 4294901760
        %v427 = vsub.f32 %v425, %v426
        %v428 = vand.u32 %v427, 4294901760
        %429 = vmatpush.msra.mxu0 %v428
        %v430 = vand.u32 %v268, 4294901760
        %v431 = vsub.f32 %v268, %v430
        %v432 = vand.u32 %v431, 4294901760
        %v433 = vsub.f32 %v431, %v432
        %v434 = vand.u32 %v433, 4294901760
        %435 = vmatpush.msra.mxu0 %v434
        %v436 = vand.u32 %v267, 4294901760
        %v437 = vsub.f32 %v267, %v436
        %v438 = vand.u32 %v437, 4294901760
        %v439 = vsub.f32 %v437, %v438
        %v440 = vand.u32 %v439, 4294901760
        %441 = vmatpush.msra.mxu0 %v440
        %v442 = vand.u32 %v301, 4294901760
        %443 = vmatmul.f32.gmra.mxu0 %v442
        %v444 = vpop.f32.mrf.mxu0
        %v445 = vadd.f32 %v344, %v444
        %446 = vdwg.mxu0
        %v447 = vand.u32 %v282, 4294901760
        %v448 = vsub.f32 %v282, %v447
        %449 = vmatpush.msra.mxu0 %v448
        %v450 = vand.u32 %v281, 4294901760
        %v451 = vsub.f32 %v281, %v450
        %452 = vmatpush.msra.mxu0 %v451
        %v453 = vand.u32 %v280, 4294901760
        %v454 = vsub.f32 %v280, %v453
        %455 = vmatpush.msra.mxu0 %v454
        %v456 = vand.u32 %v279, 4294901760
        %v457 = vsub.f32 %v279, %v456
        %458 = vmatpush.msra.mxu0 %v457
        %v459 = vand.u32 %v278, 4294901760
        %v460 = vsub.f32 %v278, %v459
        %461 = vmatpush.msra.mxu0 %v460
        %v462 = vand.u32 %v277, 4294901760
        %v463 = vsub.f32 %v277, %v462
        %464 = vmatpush.msra.mxu0 %v463
        %v465 = vand.u32 %v276, 4294901760
        %v466 = vsub.f32 %v276, %v465
        %467 = vmatpush.msra.mxu0 %v466
        %v468 = vand.u32 %v275, 4294901760
        %v469 = vsub.f32 %v275, %v468
        %470 = vmatpush.msra.mxu0 %v469
        %v471 = vand.u32 %v274, 4294901760
        %v472 = vsub.f32 %v274, %v471
        %473 = vmatpush.msra.mxu0 %v472
        %v474 = vand.u32 %v273, 4294901760
        %v475 = vsub.f32 %v273, %v474
        %476 = vmatpush.msra.mxu0 %v475
        %v477 = vand.u32 %v272, 4294901760
        %v478 = vsub.f32 %v272, %v477
        %479 = vmatpush.msra.mxu0 %v478
        %v480 = vand.u32 %v271, 4294901760
        %v481 = vsub.f32 %v271, %v480
        %482 = vmatpush.msra.mxu0 %v481
        %v483 = vand.u32 %v270, 4294901760
        %v484 = vsub.f32 %v270, %v483
        %485 = vmatpush.msra.mxu0 %v484
        %v486 = vand.u32 %v269, 4294901760
        %v487 = vsub.f32 %v269, %v486
        %488 = vmatpush.msra.mxu0 %v487
        %v489 = vand.u32 %v268, 4294901760
        %v490 = vsub.f32 %v268, %v489
        %491 = vmatpush.msra.mxu0 %v490
        %v492 = vand.u32 %v267, 4294901760
        %v493 = vsub.f32 %v267, %v492
        %494 = vmatpush.msra.mxu0 %v493
        %v495 = vand.u32 %v301, 4294901760
        %v496 = vsub.f32 %v301, %v495
        %497 = vmatmul.f32.gmra.mxu0 %v496
        %v498 = vpop.f32.mrf.mxu0
        %v499 = vadd.f32 %v445, %v498
        %500 = vdwg.mxu0
        %v501 = vand.u32 %v282, 4294901760
        %502 = vmatpush.msra.mxu0 %v501
        %v503 = vand.u32 %v281, 4294901760
        %504 = vmatpush.msra.mxu0 %v503
        %v505 = vand.u32 %v280, 4294901760
        %506 = vmatpush.msra.mxu0 %v505
        %v507 = vand.u32 %v279, 4294901760
        %508 = vmatpush.msra.mxu0 %v507
        %v509 = vand.u32 %v278, 4294901760
        %510 = vmatpush.msra.mxu0 %v509
        %v511 = vand.u32 %v277, 4294901760
        %512 = vmatpush.msra.mxu0 %v511
        %v513 = vand.u32 %v276, 4294901760
        %514 = vmatpush.msra.mxu0 %v513
        %v515 = vand.u32 %v275, 4294901760
        %516 = vmatpush.msra.mxu0 %v515
        %v517 = vand.u32 %v274, 4294901760
        %518 = vmatpush.msra.mxu0 %v517
        %v519 = vand.u32 %v273, 4294901760
        %520 = vmatpush.msra.mxu0 %v519
        %v521 = vand.u32 %v272, 4294901760
        %522 = vmatpush.msra.mxu0 %v521
        %v523 = vand.u32 %v271, 4294901760
        %524 = vmatpush.msra.mxu0 %v523
        %v525 = vand.u32 %v270, 4294901760
        %526 = vmatpush.msra.mxu0 %v525
        %v527 = vand.u32 %v269, 4294901760
        %528 = vmatpush.msra.mxu0 %v527
        %v529 = vand.u32 %v268, 4294901760
        %530 = vmatpush.msra.mxu0 %v529
        %v531 = vand.u32 %v267, 4294901760
        %532 = vmatpush.msra.mxu0 %v531
        %v533 = vand.u32 %v301, 4294901760
        %v534 = vsub.f32 %v301, %v533
        %v535 = vand.u32 %v534, 4294901760
        %536 = vmatmul.f32.gmra.mxu0 %v535
        %v537 = vpop.f32.mrf.mxu0
        %v538 = vadd.f32 %v499, %v537
        %539 = vdwg.mxu0
        %v540 = vand.u32 %v282, 4294901760
        %v541 = vsub.f32 %v282, %v540
        %v542 = vand.u32 %v541, 4294901760
        %543 = vmatpush.msra.mxu0 %v542
        %v544 = vand.u32 %v281, 4294901760
        %v545 = vsub.f32 %v281, %v544
        %v546 = vand.u32 %v545, 4294901760
        %547 = vmatpush.msra.mxu0 %v546
        %v548 = vand.u32 %v280, 4294901760
        %v549 = vsub.f32 %v280, %v548
        %v550 = vand.u32 %v549, 4294901760
        %551 = vmatpush.msra.mxu0 %v550
        %v552 = vand.u32 %v279, 4294901760
        %v553 = vsub.f32 %v279, %v552
        %v554 = vand.u32 %v553, 4294901760
        %555 = vmatpush.msra.mxu0 %v554
        %v556 = vand.u32 %v278, 4294901760
        %v557 = vsub.f32 %v278, %v556
        %v558 = vand.u32 %v557, 4294901760
        %559 = vmatpush.msra.mxu0 %v558
        %v560 = vand.u32 %v277, 4294901760
        %v561 = vsub.f32 %v277, %v560
        %v562 = vand.u32 %v561, 4294901760
        %563 = vmatpush.msra.mxu0 %v562
        %v564 = vand.u32 %v276, 4294901760
        %v565 = vsub.f32 %v276, %v564
        %v566 = vand.u32 %v565, 4294901760
        %567 = vmatpush.msra.mxu0 %v566
        %v568 = vand.u32 %v275, 4294901760
        %v569 = vsub.f32 %v275, %v568
        %v570 = vand.u32 %v569, 4294901760
        %571 = vmatpush.msra.mxu0 %v570
        %v572 = vand.u32 %v274, 4294901760
        %v573 = vsub.f32 %v274, %v572
        %v574 = vand.u32 %v573, 4294901760
        %575 = vmatpush.msra.mxu0 %v574
        %v576 = vand.u32 %v273, 4294901760
        %v577 = vsub.f32 %v273, %v576
        %v578 = vand.u32 %v577, 4294901760
        %579 = vmatpush.msra.mxu0 %v578
        %v580 = vand.u32 %v272, 4294901760
        %v581 = vsub.f32 %v272, %v580
        %v582 = vand.u32 %v581, 4294901760
        %583 = vmatpush.msra.mxu0 %v582
        %v584 = vand.u32 %v271, 4294901760
        %v585 = vsub.f32 %v271, %v584
        %v586 = vand.u32 %v585, 4294901760
        %587 = vmatpush.msra.mxu0 %v586
        %v588 = vand.u32 %v270, 4294901760
        %v589 = vsub.f32 %v270, %v588
        %v590 = vand.u32 %v589, 4294901760
        %591 = vmatpush.msra.mxu0 %v590
        %v592 = vand.u32 %v269, 4294901760
        %v593 = vsub.f32 %v269, %v592
        %v594 = vand.u32 %v593, 4294901760
        %595 = vmatpush.msra.mxu0 %v594
        %v596 = vand.u32 %v268, 4294901760
        %v597 = vsub.f32 %v268, %v596
        %v598 = vand.u32 %v597, 4294901760
        %599 = vmatpush.msra.mxu0 %v598
        %v600 = vand.u32 %v267, 4294901760
        %v601 = vsub.f32 %v267, %v600
        %v602 = vand.u32 %v601, 4294901760
        %603 = vmatpush.msra.mxu0 %v602
        %v604 = vand.u32 %v301, 4294901760
        %605 = vmatmul.f32.gmra.mxu0 %v604
        %v606 = vpop.f32.mrf.mxu0
        %v607 = vadd.f32 %v538, %v606
        %608 = vdwg.mxu0
        %v609 = vand.u32 %v282, 4294901760
        %610 = vmatpush.msra.mxu0 %v609
        %v611 = vand.u32 %v281, 4294901760
        %612 = vmatpush.msra.mxu0 %v611
        %v613 = vand.u32 %v280, 4294901760
        %614 = vmatpush.msra.mxu0 %v613
        %v615 = vand.u32 %v279, 4294901760
        %616 = vmatpush.msra.mxu0 %v615
        %v617 = vand.u32 %v278, 4294901760
        %618 = vmatpush.msra.mxu0 %v617
        %v619 = vand.u32 %v277, 4294901760
        %620 = vmatpush.msra.mxu0 %v619
        %v621 = vand.u32 %v276, 4294901760
        %622 = vmatpush.msra.mxu0 %v621
        %v623 = vand.u32 %v275, 4294901760
        %624 = vmatpush.msra.mxu0 %v623
        %v625 = vand.u32 %v274, 4294901760
        %626 = vmatpush.msra.mxu0 %v625
        %v627 = vand.u32 %v273, 4294901760
        %628 = vmatpush.msra.mxu0 %v627
        %v629 = vand.u32 %v272, 4294901760
        %630 = vmatpush.msra.mxu0 %v629
        %v631 = vand.u32 %v271, 4294901760
        %632 = vmatpush.msra.mxu0 %v631
        %v633 = vand.u32 %v270, 4294901760
        %634 = vmatpush.msra.mxu0 %v633
        %v635 = vand.u32 %v269, 4294901760
        %636 = vmatpush.msra.mxu0 %v635
        %v637 = vand.u32 %v268, 4294901760
        %638 = vmatpush.msra.mxu0 %v637
        %v639 = vand.u32 %v267, 4294901760
        %640 = vmatpush.msra.mxu0 %v639
        %v641 = vand.u32 %v301, 4294901760
        %642 = vmatmul.f32.gmra.mxu0 %v641
        %v643 = vpop.f32.mrf.mxu0
        %v644 = vadd.f32 %v607, %v643
        %645 = vdwg.mxu0
        %v646 = vand.u32 %v298, 4294901760
        %647 = vmatpush.msra.mxu0 %v646
        %v648 = vand.u32 %v297, 4294901760
        %649 = vmatpush.msra.mxu0 %v648
        %v650 = vand.u32 %v296, 4294901760
        %651 = vmatpush.msra.mxu0 %v650
        %v652 = vand.u32 %v295, 4294901760
        %653 = vmatpush.msra.mxu0 %v652
        %v654 = vand.u32 %v294, 4294901760
        %655 = vmatpush.msra.mxu0 %v654
        %v656 = vand.u32 %v293, 4294901760
        %657 = vmatpush.msra.mxu0 %v656
        %v658 = vand.u32 %v292, 4294901760
        %659 = vmatpush.msra.mxu0 %v658
        %v660 = vand.u32 %v291, 4294901760
        %661 = vmatpush.msra.mxu0 %v660
        %v662 = vand.u32 %v290, 4294901760
        %663 = vmatpush.msra.mxu0 %v662
        %v664 = vand.u32 %v289, 4294901760
        %665 = vmatpush.msra.mxu0 %v664
        %v666 = vand.u32 %v288, 4294901760
        %667 = vmatpush.msra.mxu0 %v666
        %v668 = vand.u32 %v287, 4294901760
        %669 = vmatpush.msra.mxu0 %v668
        %v670 = vand.u32 %v286, 4294901760
        %671 = vmatpush.msra.mxu0 %v670
        %v672 = vand.u32 %v285, 4294901760
        %673 = vmatpush.msra.mxu0 %v672
        %v674 = vand.u32 %v284, 4294901760
        %675 = vmatpush.msra.mxu0 %v674
        %v676 = vand.u32 %v283, 4294901760
        %677 = vmatpush.msra.mxu0 %v676
        %v678 = vand.u32 %v302, 4294901760
        %v679 = vsub.f32 %v302, %v678
        %v680 = vand.u32 %v679, 4294901760
        %v681 = vsub.f32 %v679, %v680
        %v682 = vand.u32 %v681, 4294901760
        %683 = vmatmul.f32.gmra.mxu0 %v682
        %v684 = vpop.f32.mrf.mxu0
        %v685 = vadd.f32 %v644, %v684
        %686 = vdwg.mxu0
        %v687 = vand.u32 %v298, 4294901760
        %v688 = vsub.f32 %v298, %v687
        %v689 = vand.u32 %v688, 4294901760
        %v690 = vsub.f32 %v688, %v689
        %v691 = vand.u32 %v690, 4294901760
        %692 = vmatpush.msra.mxu0 %v691
        %v693 = vand.u32 %v297, 4294901760
        %v694 = vsub.f32 %v297, %v693
        %v695 = vand.u32 %v694, 4294901760
        %v696 = vsub.f32 %v694, %v695
        %v697 = vand.u32 %v696, 4294901760
        %698 = vmatpush.msra.mxu0 %v697
        %v699 = vand.u32 %v296, 4294901760
        %v700 = vsub.f32 %v296, %v699
        %v701 = vand.u32 %v700, 4294901760
        %v702 = vsub.f32 %v700, %v701
        %v703 = vand.u32 %v702, 4294901760
        %704 = vmatpush.msra.mxu0 %v703
        %v705 = vand.u32 %v295, 4294901760
        %v706 = vsub.f32 %v295, %v705
        %v707 = vand.u32 %v706, 4294901760
        %v708 = vsub.f32 %v706, %v707
        %v709 = vand.u32 %v708, 4294901760
        %710 = vmatpush.msra.mxu0 %v709
        %v711 = vand.u32 %v294, 4294901760
        %v712 = vsub.f32 %v294, %v711
        %v713 = vand.u32 %v712, 4294901760
        %v714 = vsub.f32 %v712, %v713
        %v715 = vand.u32 %v714, 4294901760
        %716 = vmatpush.msra.mxu0 %v715
        %v717 = vand.u32 %v293, 4294901760
        %v718 = vsub.f32 %v293, %v717
        %v719 = vand.u32 %v718, 4294901760
        %v720 = vsub.f32 %v718, %v719
        %v721 = vand.u32 %v720, 4294901760
        %722 = vmatpush.msra.mxu0 %v721
        %v723 = vand.u32 %v292, 4294901760
        %v724 = vsub.f32 %v292, %v723
        %v725 = vand.u32 %v724, 4294901760
        %v726 = vsub.f32 %v724, %v725
        %v727 = vand.u32 %v726, 4294901760
        %728 = vmatpush.msra.mxu0 %v727
        %v729 = vand.u32 %v291, 4294901760
        %v730 = vsub.f32 %v291, %v729
        %v731 = vand.u32 %v730, 4294901760
        %v732 = vsub.f32 %v730, %v731
        %v733 = vand.u32 %v732, 4294901760
        %734 = vmatpush.msra.mxu0 %v733
        %v735 = vand.u32 %v290, 4294901760
        %v736 = vsub.f32 %v290, %v735
        %v737 = vand.u32 %v736, 4294901760
        %v738 = vsub.f32 %v736, %v737
        %v739 = vand.u32 %v738, 4294901760
        %740 = vmatpush.msra.mxu0 %v739
        %v741 = vand.u32 %v289, 4294901760
        %v742 = vsub.f32 %v289, %v741
        %v743 = vand.u32 %v742, 4294901760
        %v744 = vsub.f32 %v742, %v743
        %v745 = vand.u32 %v744, 4294901760
        %746 = vmatpush.msra.mxu0 %v745
        %v747 = vand.u32 %v288, 4294901760
        %v748 = vsub.f32 %v288, %v747
        %v749 = vand.u32 %v748, 4294901760
        %v750 = vsub.f32 %v748, %v749
        %v751 = vand.u32 %v750, 4294901760
        %752 = vmatpush.msra.mxu0 %v751
        %v753 = vand.u32 %v287, 4294901760
        %v754 = vsub.f32 %v287, %v753
        %v755 = vand.u32 %v754, 4294901760
        %v756 = vsub.f32 %v754, %v755
        %v757 = vand.u32 %v756, 4294901760
        %758 = vmatpush.msra.mxu0 %v757
        %v759 = vand.u32 %v286, 4294901760
        %v760 = vsub.f32 %v286, %v759
        %v761 = vand.u32 %v760, 4294901760
        %v762 = vsub.f32 %v760, %v761
        %v763 = vand.u32 %v762, 4294901760
        %764 = vmatpush.msra.mxu0 %v763
        %v765 = vand.u32 %v285, 4294901760
        %v766 = vsub.f32 %v285, %v765
        %v767 = vand.u32 %v766, 4294901760
        %v768 = vsub.f32 %v766, %v767
        %v769 = vand.u32 %v768, 4294901760
        %770 = vmatpush.msra.mxu0 %v769
        %v771 = vand.u32 %v284, 4294901760
        %v772 = vsub.f32 %v284, %v771
        %v773 = vand.u32 %v772, 4294901760
        %v774 = vsub.f32 %v772, %v773
        %v775 = vand.u32 %v774, 4294901760
        %776 = vmatpush.msra.mxu0 %v775
        %v777 = vand.u32 %v283, 4294901760
        %v778 = vsub.f32 %v283, %v777
        %v779 = vand.u32 %v778, 4294901760
        %v780 = vsub.f32 %v778, %v779
        %v781 = vand.u32 %v780, 4294901760
        %782 = vmatpush.msra.mxu0 %v781
        %v783 = vand.u32 %v302, 4294901760
        %784 = vmatmul.f32.gmra.mxu0 %v783
        %v785 = vpop.f32.mrf.mxu0
        %v786 = vadd.f32 %v685, %v785
        %787 = vdwg.mxu0
        %v788 = vand.u32 %v298, 4294901760
        %v789 = vsub.f32 %v298, %v788
        %790 = vmatpush.msra.mxu0 %v789
        %v791 = vand.u32 %v297, 4294901760
        %v792 = vsub.f32 %v297, %v791
        %793 = vmatpush.msra.mxu0 %v792
        %v794 = vand.u32 %v296, 4294901760
        %v795 = vsub.f32 %v296, %v794
        %796 = vmatpush.msra.mxu0 %v795
        %v797 = vand.u32 %v295, 4294901760
        %v798 = vsub.f32 %v295, %v797
        %799 = vmatpush.msra.mxu0 %v798
        %v800 = vand.u32 %v294, 4294901760
        %v801 = vsub.f32 %v294, %v800
        %802 = vmatpush.msra.mxu0 %v801
        %v803 = vand.u32 %v293, 4294901760
        %v804 = vsub.f32 %v293, %v803
        %805 = vmatpush.msra.mxu0 %v804
        %v806 = vand.u32 %v292, 4294901760
        %v807 = vsub.f32 %v292, %v806
        %808 = vmatpush.msra.mxu0 %v807
        %v809 = vand.u32 %v291, 4294901760
        %v810 = vsub.f32 %v291, %v809
        %811 = vmatpush.msra.mxu0 %v810
        %v812 = vand.u32 %v290, 4294901760
        %v813 = vsub.f32 %v290, %v812
        %814 = vmatpush.msra.mxu0 %v813
        %v815 = vand.u32 %v289, 4294901760
        %v816 = vsub.f32 %v289, %v815
        %817 = vmatpush.msra.mxu0 %v816
        %v818 = vand.u32 %v288, 4294901760
        %v819 = vsub.f32 %v288, %v818
        %820 = vmatpush.msra.mxu0 %v819
        %v821 = vand.u32 %v287, 4294901760
        %v822 = vsub.f32 %v287, %v821
        %823 = vmatpush.msra.mxu0 %v822
        %v824 = vand.u32 %v286, 4294901760
        %v825 = vsub.f32 %v286, %v824
        %826 = vmatpush.msra.mxu0 %v825
        %v827 = vand.u32 %v285, 4294901760
        %v828 = vsub.f32 %v285, %v827
        %829 = vmatpush.msra.mxu0 %v828
        %v830 = vand.u32 %v284, 4294901760
        %v831 = vsub.f32 %v284, %v830
        %832 = vmatpush.msra.mxu0 %v831
        %v833 = vand.u32 %v283, 4294901760
        %v834 = vsub.f32 %v283, %v833
        %835 = vmatpush.msra.mxu0 %v834
        %v836 = vand.u32 %v302, 4294901760
        %v837 = vsub.f32 %v302, %v836
        %838 = vmatmul.f32.gmra.mxu0 %v837
        %v839 = vpop.f32.mrf.mxu0
        %v840 = vadd.f32 %v786, %v839
        %841 = vdwg.mxu0
        %v842 = vand.u32 %v298, 4294901760
        %843 = vmatpush.msra.mxu0 %v842
        %v844 = vand.u32 %v297, 4294901760
        %845 = vmatpush.msra.mxu0 %v844
        %v846 = vand.u32 %v296, 4294901760
        %847 = vmatpush.msra.mxu0 %v846
        %v848 = vand.u32 %v295, 4294901760
        %849 = vmatpush.msra.mxu0 %v848
        %v850 = vand.u32 %v294, 4294901760
        %851 = vmatpush.msra.mxu0 %v850
        %v852 = vand.u32 %v293, 4294901760
        %853 = vmatpush.msra.mxu0 %v852
        %v854 = vand.u32 %v292, 4294901760
        %855 = vmatpush.msra.mxu0 %v854
        %v856 = vand.u32 %v291, 4294901760
        %857 = vmatpush.msra.mxu0 %v856
        %v858 = vand.u32 %v290, 4294901760
        %859 = vmatpush.msra.mxu0 %v858
        %v860 = vand.u32 %v289, 4294901760
        %861 = vmatpush.msra.mxu0 %v860
        %v862 = vand.u32 %v288, 4294901760
        %863 = vmatpush.msra.mxu0 %v862
        %v864 = vand.u32 %v287, 4294901760
        %865 = vmatpush.msra.mxu0 %v864
        %v866 = vand.u32 %v286, 4294901760
        %867 = vmatpush.msra.mxu0 %v866
        %v868 = vand.u32 %v285, 4294901760
        %869 = vmatpush.msra.mxu0 %v868
        %v870 = vand.u32 %v284, 4294901760
        %871 = vmatpush.msra.mxu0 %v870
        %v872 = vand.u32 %v283, 4294901760
        %873 = vmatpush.msra.mxu0 %v872
        %v874 = vand.u32 %v302, 4294901760
        %v875 = vsub.f32 %v302, %v874
        %v876 = vand.u32 %v875, 4294901760
        %877 = vmatmul.f32.gmra.mxu0 %v876
        %v878 = vpop.f32.mrf.mxu0
        %v879 = vadd.f32 %v840, %v878
        %880 = vdwg.mxu0
        %v881 = vand.u32 %v298, 4294901760
        %v882 = vsub.f32 %v298, %v881
        %v883 = vand.u32 %v882, 4294901760
        %884 = vmatpush.msra.mxu0 %v883
        %v885 = vand.u32 %v297, 4294901760
        %v886 = vsub.f32 %v297, %v885
        %v887 = vand.u32 %v886, 4294901760
        %888 = vmatpush.msra.mxu0 %v887
        %v889 = vand.u32 %v296, 4294901760
        %v890 = vsub.f32 %v296, %v889
        %v891 = vand.u32 %v890, 4294901760
        %892 = vmatpush.msra.mxu0 %v891
        %v893 = vand.u32 %v295, 4294901760
        %v894 = vsub.f32 %v295, %v893
        %v895 = vand.u32 %v894, 4294901760
        %896 = vmatpush.msra.mxu0 %v895
        %v897 = vand.u32 %v294, 4294901760
        %v898 = vsub.f32 %v294, %v897
        %v899 = vand.u32 %v898, 4294901760
        %900 = vmatpush.msra.mxu0 %v899
        %v901 = vand.u32 %v293, 4294901760
        %v902 = vsub.f32 %v293, %v901
        %v903 = vand.u32 %v902, 4294901760
        %904 = vmatpush.msra.mxu0 %v903
        %v905 = vand.u32 %v292, 4294901760
        %v906 = vsub.f32 %v292, %v905
        %v907 = vand.u32 %v906, 4294901760
        %908 = vmatpush.msra.mxu0 %v907
        %v909 = vand.u32 %v291, 4294901760
        %v910 = vsub.f32 %v291, %v909
        %v911 = vand.u32 %v910, 4294901760
        %912 = vmatpush.msra.mxu0 %v911
        %v913 = vand.u32 %v290, 4294901760
        %v914 = vsub.f32 %v290, %v913
        %v915 = vand.u32 %v914, 4294901760
        %916 = vmatpush.msra.mxu0 %v915
        %v917 = vand.u32 %v289, 4294901760
        %v918 = vsub.f32 %v289, %v917
        %v919 = vand.u32 %v918, 4294901760
        %920 = vmatpush.msra.mxu0 %v919
        %v921 = vand.u32 %v288, 4294901760
        %v922 = vsub.f32 %v288, %v921
        %v923 = vand.u32 %v922, 4294901760
        %924 = vmatpush.msra.mxu0 %v923
        %v925 = vand.u32 %v287, 4294901760
        %v926 = vsub.f32 %v287, %v925
        %v927 = vand.u32 %v926, 4294901760
        %928 = vmatpush.msra.mxu0 %v927
        %v929 = vand.u32 %v286, 4294901760
        %v930 = vsub.f32 %v286, %v929
        %v931 = vand.u32 %v930, 4294901760
        %932 = vmatpush.msra.mxu0 %v931
        %v933 = vand.u32 %v285, 4294901760
        %v934 = vsub.f32 %v285, %v933
        %v935 = vand.u32 %v934, 4294901760
        %936 = vmatpush.msra.mxu0 %v935
        %v937 = vand.u32 %v284, 4294901760
        %v938 = vsub.f32 %v284, %v937
        %v939 = vand.u32 %v938, 4294901760
        %940 = vmatpush.msra.mxu0 %v939
        %v941 = vand.u32 %v283, 4294901760
        %v942 = vsub.f32 %v283, %v941
        %v943 = vand.u32 %v942, 4294901760
        %944 = vmatpush.msra.mxu0 %v943
        %v945 = vand.u32 %v302, 4294901760
        %946 = vmatmul.f32.gmra.mxu0 %v945
        %v947 = vpop.f32.mrf.mxu0
        %v948 = vadd.f32 %v879, %v947
        %949 = vdwg.mxu0
        %v950 = vand.u32 %v298, 4294901760
        %951 = vmatpush.msra.mxu0 %v950
        %v952 = vand.u32 %v297, 4294901760
        %953 = vmatpush.msra.mxu0 %v952
        %v954 = vand.u32 %v296, 4294901760
        %955 = vmatpush.msra.mxu0 %v954
        %v956 = vand.u32 %v295, 4294901760
        %957 = vmatpush.msra.mxu0 %v956
        %v958 = vand.u32 %v294, 4294901760
        %959 = vmatpush.msra.mxu0 %v958
        %v960 = vand.u32 %v293, 4294901760
        %961 = vmatpush.msra.mxu0 %v960
        %v962 = vand.u32 %v292, 4294901760
        %963 = vmatpush.msra.mxu0 %v962
        %v964 = vand.u32 %v291, 4294901760
        %965 = vmatpush.msra.mxu0 %v964
        %v966 = vand.u32 %v290, 4294901760
        %967 = vmatpush.msra.mxu0 %v966
        %v968 = vand.u32 %v289, 4294901760
        %969 = vmatpush.msra.mxu0 %v968
        %v970 = vand.u32 %v288, 4294901760
        %971 = vmatpush.msra.mxu0 %v970
        %v972 = vand.u32 %v287, 4294901760
        %973 = vmatpush.msra.mxu0 %v972
        %v974 = vand.u32 %v286, 4294901760
        %975 = vmatpush.msra.mxu0 %v974
        %v976 = vand.u32 %v285, 4294901760
        %977 = vmatpush.msra.mxu0 %v976
        %v978 = vand.u32 %v284, 4294901760
        %979 = vmatpush.msra.mxu0 %v978
        %v980 = vand.u32 %v283, 4294901760
        %981 = vmatpush.msra.mxu0 %v980
        %v982 = vand.u32 %v302, 4294901760
        %983 = vmatmul.f32.gmra.mxu0 %v982
        %v984 = vpop.f32.mrf.mxu0
        %v985 = vadd.f32 %v948, %v984
        %986 = vdwg.mxu0
        %987 = vst [vmem:[#allocation2] sm:$0xf] %v985
        %v988 = vld [vmem:[#allocation2] sm:$0x1]
        %v989 = vld [vmem:[#allocation8] sm:$0xf]
        %v990 = vperm.slane %v988, 0
        %v991 = vmul.f32 %v990, %v989
        %v992 = vld [vmem:[#allocation2 + $0x1] sm:$0x1]
        %s993 = scalar_lea.vmem [#allocation8], 4
        %v994 = vld [vmem:[%s993] sm:$0xf]
        %v995 = vperm.slane %v992, 0
        %v996 = vmul.f32 %v995, %v994
        %v997 = vadd.f32 %v991, %v996
        %v998 = vld [vmem:[#allocation2 + $0x2] sm:$0x1]
        %s999 = scalar_lea.vmem [#allocation8], 8
        %v1000 = vld [vmem:[%s999] sm:$0xf]
        %v1001 = vperm.slane %v998, 0
        %v1002 = vmul.f32 %v1001, %v1000
        %v1003 = vadd.f32 %v997, %v1002
        %v1004 = vld [vmem:[#allocation2 + $0x3] sm:$0x1]
        %s1005 = scalar_lea.vmem [#allocation8], 12
        %v1006 = vld [vmem:[%s1005] sm:$0xf]
        %v1007 = vperm.slane %v1004, 0
        %v1008 = vmul.f32 %v1007, %v1006
        %v1009 = vadd.f32 %v1003, %v1008
        %v1010 = vld [vmem:[#allocation9] sm:$0xff]
        %v1011 = vld [vmem:[#allocation9 + $0x8] sm:$0xff]
        %v1012 = vld [vmem:[#allocation9 + $0x10] sm:$0xff]
        %v1013 = vld [vmem:[#allocation9 + $0x18] sm:$0xff]
        %v1014 = vld [vmem:[#allocation9 + $0x20] sm:$0xff]
        %v1015 = vld [vmem:[#allocation9 + $0x28] sm:$0xff]
        %v1016 = vld [vmem:[#allocation9 + $0x30] sm:$0xff]
        %v1017 = vld [vmem:[#allocation9 + $0x38] sm:$0xff]
        %v1018 = vld [vmem:[#allocation9 + $0x40] sm:$0xff]
        %v1019 = vld [vmem:[#allocation9 + $0x48] sm:$0xff]
        %v1020 = vld [vmem:[#allocation9 + $0x50] sm:$0xff]
        %v1021 = vld [vmem:[#allocation9 + $0x58] sm:$0xff]
        %v1022 = vld [vmem:[#allocation9 + $0x60] sm:$0xff]
        %v1023 = vld [vmem:[#allocation9 + $0x68] sm:$0xff]
        %v1024 = vld [vmem:[#allocation9 + $0x70] sm:$0xff]
        %v1025 = vld [vmem:[#allocation9 + $0x78] sm:$0xff]
        %v1026 = vld [vmem:[#allocation9 + $0x80] sm:$0xff]
        %v1027 = vld [vmem:[#allocation9 + $0x88] sm:$0xff]
        %v1028 = vld [vmem:[#allocation9 + $0x90] sm:$0xff]
        %v1029 = vld [vmem:[#allocation9 + $0x98] sm:$0xff]
        %v1030 = vld [vmem:[#allocation9 + $0xa0] sm:$0xff]
        %v1031 = vld [vmem:[#allocation9 + $0xa8] sm:$0xff]
        %v1032 = vld [vmem:[#allocation9 + $0xb0] sm:$0xff]
        %v1033 = vld [vmem:[#allocation9 + $0xb8] sm:$0xff]
        %v1034 = vld [vmem:[#allocation9 + $0xc0] sm:$0xff]
        %v1035 = vld [vmem:[#allocation9 + $0xc8] sm:$0xff]
        %v1036 = vld [vmem:[#allocation9 + $0xd0] sm:$0xff]
        %v1037 = vld [vmem:[#allocation9 + $0xd8] sm:$0xff]
        %v1038 = vld [vmem:[#allocation9 + $0xe0] sm:$0xff]
        %v1039 = vld [vmem:[#allocation9 + $0xe8] sm:$0xff]
        %v1040 = vld [vmem:[#allocation9 + $0xf0] sm:$0xff]
        %v1041 = vld [vmem:[#allocation9 + $0xf8] sm:$0xff]
        %v1042 = vand.u32 %v1040, 4294901760
        %1043 = vmatpush.msra.mxu0 %v1042
        %v1044 = vand.u32 %v1038, 4294901760
        %1045 = vmatpush.msra.mxu0 %v1044
        %v1046 = vand.u32 %v1036, 4294901760
        %1047 = vmatpush.msra.mxu0 %v1046
        %v1048 = vand.u32 %v1034, 4294901760
        %1049 = vmatpush.msra.mxu0 %v1048
        %v1050 = vand.u32 %v1032, 4294901760
        %1051 = vmatpush.msra.mxu0 %v1050
        %v1052 = vand.u32 %v1030, 4294901760
        %1053 = vmatpush.msra.mxu0 %v1052
        %v1054 = vand.u32 %v1028, 4294901760
        %1055 = vmatpush.msra.mxu0 %v1054
        %v1056 = vand.u32 %v1026, 4294901760
        %1057 = vmatpush.msra.mxu0 %v1056
        %v1058 = vand.u32 %v1024, 4294901760
        %1059 = vmatpush.msra.mxu0 %v1058
        %v1060 = vand.u32 %v1022, 4294901760
        %1061 = vmatpush.msra.mxu0 %v1060
        %v1062 = vand.u32 %v1020, 4294901760
        %1063 = vmatpush.msra.mxu0 %v1062
        %v1064 = vand.u32 %v1018, 4294901760
        %1065 = vmatpush.msra.mxu0 %v1064
        %v1066 = vand.u32 %v1016, 4294901760
        %1067 = vmatpush.msra.mxu0 %v1066
        %v1068 = vand.u32 %v1014, 4294901760
        %1069 = vmatpush.msra.mxu0 %v1068
        %v1070 = vand.u32 %v1012, 4294901760
        %1071 = vmatpush.msra.mxu0 %v1070
        %v1072 = vand.u32 %v1010, 4294901760
        %1073 = vmatpush.msra.mxu0 %v1072
        %v1074 = vand.u32 %v1009, 4294901760
        %v1075 = vsub.f32 %v1009, %v1074
        %v1076 = vand.u32 %v1075, 4294901760
        %v1077 = vsub.f32 %v1075, %v1076
        %v1078 = vand.u32 %v1077, 4294901760
        %1079 = vmatmul.f32.gmra.mxu0 %v1078
        %v1080 = vpop.f32.mrf.mxu0
        %v1081 = vadd.f32 0.0, %v1080
        %1082 = vdwg.mxu0
        %v1083 = vand.u32 %v1040, 4294901760
        %v1084 = vsub.f32 %v1040, %v1083
        %v1085 = vand.u32 %v1084, 4294901760
        %v1086 = vsub.f32 %v1084, %v1085
        %v1087 = vand.u32 %v1086, 4294901760
        %1088 = vmatpush.msra.mxu0 %v1087
        %v1089 = vand.u32 %v1038, 4294901760
        %v1090 = vsub.f32 %v1038, %v1089
        %v1091 = vand.u32 %v1090, 4294901760
        %v1092 = vsub.f32 %v1090, %v1091
        %v1093 = vand.u32 %v1092, 4294901760
        %1094 = vmatpush.msra.mxu0 %v1093
        %v1095 = vand.u32 %v1036, 4294901760
        %v1096 = vsub.f32 %v1036, %v1095
        %v1097 = vand.u32 %v1096, 4294901760
        %v1098 = vsub.f32 %v1096, %v1097
        %v1099 = vand.u32 %v1098, 4294901760
        %1100 = vmatpush.msra.mxu0 %v1099
        %v1101 = vand.u32 %v1034, 4294901760
        %v1102 = vsub.f32 %v1034, %v1101
        %v1103 = vand.u32 %v1102, 4294901760
        %v1104 = vsub.f32 %v1102, %v1103
        %v1105 = vand.u32 %v1104, 4294901760
        %1106 = vmatpush.msra.mxu0 %v1105
        %v1107 = vand.u32 %v1032, 4294901760
        %v1108 = vsub.f32 %v1032, %v1107
        %v1109 = vand.u32 %v1108, 4294901760
        %v1110 = vsub.f32 %v1108, %v1109
        %v1111 = vand.u32 %v1110, 4294901760
        %1112 = vmatpush.msra.mxu0 %v1111
        %v1113 = vand.u32 %v1030, 4294901760
        %v1114 = vsub.f32 %v1030, %v1113
        %v1115 = vand.u32 %v1114, 4294901760
        %v1116 = vsub.f32 %v1114, %v1115
        %v1117 = vand.u32 %v1116, 4294901760
        %1118 = vmatpush.msra.mxu0 %v1117
        %v1119 = vand.u32 %v1028, 4294901760
        %v1120 = vsub.f32 %v1028, %v1119
        %v1121 = vand.u32 %v1120, 4294901760
        %v1122 = vsub.f32 %v1120, %v1121
        %v1123 = vand.u32 %v1122, 4294901760
        %1124 = vmatpush.msra.mxu0 %v1123
        %v1125 = vand.u32 %v1026, 4294901760
        %v1126 = vsub.f32 %v1026, %v1125
        %v1127 = vand.u32 %v1126, 4294901760
        %v1128 = vsub.f32 %v1126, %v1127
        %v1129 = vand.u32 %v1128, 4294901760
        %1130 = vmatpush.msra.mxu0 %v1129
        %v1131 = vand.u32 %v1024, 4294901760
        %v1132 = vsub.f32 %v1024, %v1131
        %v1133 = vand.u32 %v1132, 4294901760
        %v1134 = vsub.f32 %v1132, %v1133
        %v1135 = vand.u32 %v1134, 4294901760
        %1136 = vmatpush.msra.mxu0 %v1135
        %v1137 = vand.u32 %v1022, 4294901760
        %v1138 = vsub.f32 %v1022, %v1137
        %v1139 = vand.u32 %v1138, 4294901760
        %v1140 = vsub.f32 %v1138, %v1139
        %v1141 = vand.u32 %v1140, 4294901760
        %1142 = vmatpush.msra.mxu0 %v1141
        %v1143 = vand.u32 %v1020, 4294901760
        %v1144 = vsub.f32 %v1020, %v1143
        %v1145 = vand.u32 %v1144, 4294901760
        %v1146 = vsub.f32 %v1144, %v1145
        %v1147 = vand.u32 %v1146, 4294901760
        %1148 = vmatpush.msra.mxu0 %v1147
        %v1149 = vand.u32 %v1018, 4294901760
        %v1150 = vsub.f32 %v1018, %v1149
        %v1151 = vand.u32 %v1150, 4294901760
        %v1152 = vsub.f32 %v1150, %v1151
        %v1153 = vand.u32 %v1152, 4294901760
        %1154 = vmatpush.msra.mxu0 %v1153
        %v1155 = vand.u32 %v1016, 4294901760
        %v1156 = vsub.f32 %v1016, %v1155
        %v1157 = vand.u32 %v1156, 4294901760
        %v1158 = vsub.f32 %v1156, %v1157
        %v1159 = vand.u32 %v1158, 4294901760
        %1160 = vmatpush.msra.mxu0 %v1159
        %v1161 = vand.u32 %v1014, 4294901760
        %v1162 = vsub.f32 %v1014, %v1161
        %v1163 = vand.u32 %v1162, 4294901760
        %v1164 = vsub.f32 %v1162, %v1163
        %v1165 = vand.u32 %v1164, 4294901760
        %1166 = vmatpush.msra.mxu0 %v1165
        %v1167 = vand.u32 %v1012, 4294901760
        %v1168 = vsub.f32 %v1012, %v1167
        %v1169 = vand.u32 %v1168, 4294901760
        %v1170 = vsub.f32 %v1168, %v1169
        %v1171 = vand.u32 %v1170, 4294901760
        %1172 = vmatpush.msra.mxu0 %v1171
        %v1173 = vand.u32 %v1010, 4294901760
        %v1174 = vsub.f32 %v1010, %v1173
        %v1175 = vand.u32 %v1174, 4294901760
        %v1176 = vsub.f32 %v1174, %v1175
        %v1177 = vand.u32 %v1176, 4294901760
        %1178 = vmatpush.msra.mxu0 %v1177
        %v1179 = vand.u32 %v1009, 4294901760
        %1180 = vmatmul.f32.gmra.mxu0 %v1179
        %v1181 = vpop.f32.mrf.mxu0
        %v1182 = vadd.f32 %v1081, %v1181
        %1183 = vdwg.mxu0
        %v1184 = vand.u32 %v1040, 4294901760
        %v1185 = vsub.f32 %v1040, %v1184
        %1186 = vmatpush.msra.mxu0 %v1185
        %v1187 = vand.u32 %v1038, 4294901760
        %v1188 = vsub.f32 %v1038, %v1187
        %1189 = vmatpush.msra.mxu0 %v1188
        %v1190 = vand.u32 %v1036, 4294901760
        %v1191 = vsub.f32 %v1036, %v1190
        %1192 = vmatpush.msra.mxu0 %v1191
        %v1193 = vand.u32 %v1034, 4294901760
        %v1194 = vsub.f32 %v1034, %v1193
        %1195 = vmatpush.msra.mxu0 %v1194
        %v1196 = vand.u32 %v1032, 4294901760
        %v1197 = vsub.f32 %v1032, %v1196
        %1198 = vmatpush.msra.mxu0 %v1197
        %v1199 = vand.u32 %v1030, 4294901760
        %v1200 = vsub.f32 %v1030, %v1199
        %1201 = vmatpush.msra.mxu0 %v1200
        %v1202 = vand.u32 %v1028, 4294901760
        %v1203 = vsub.f32 %v1028, %v1202
        %1204 = vmatpush.msra.mxu0 %v1203
        %v1205 = vand.u32 %v1026, 4294901760
        %v1206 = vsub.f32 %v1026, %v1205
        %1207 = vmatpush.msra.mxu0 %v1206
        %v1208 = vand.u32 %v1024, 4294901760
        %v1209 = vsub.f32 %v1024, %v1208
        %1210 = vmatpush.msra.mxu0 %v1209
        %v1211 = vand.u32 %v1022, 4294901760
        %v1212 = vsub.f32 %v1022, %v1211
        %1213 = vmatpush.msra.mxu0 %v1212
        %v1214 = vand.u32 %v1020, 4294901760
        %v1215 = vsub.f32 %v1020, %v1214
        %1216 = vmatpush.msra.mxu0 %v1215
        %v1217 = vand.u32 %v1018, 4294901760
        %v1218 = vsub.f32 %v1018, %v1217
        %1219 = vmatpush.msra.mxu0 %v1218
        %v1220 = vand.u32 %v1016, 4294901760
        %v1221 = vsub.f32 %v1016, %v1220
        %1222 = vmatpush.msra.mxu0 %v1221
        %v1223 = vand.u32 %v1014, 4294901760
        %v1224 = vsub.f32 %v1014, %v1223
        %1225 = vmatpush.msra.mxu0 %v1224
        %v1226 = vand.u32 %v1012, 4294901760
        %v1227 = vsub.f32 %v1012, %v1226
        %1228 = vmatpush.msra.mxu0 %v1227
        %v1229 = vand.u32 %v1010, 4294901760
        %v1230 = vsub.f32 %v1010, %v1229
        %1231 = vmatpush.msra.mxu0 %v1230
        %v1232 = vand.u32 %v1009, 4294901760
        %v1233 = vsub.f32 %v1009, %v1232
        %1234 = vmatmul.f32.gmra.mxu0 %v1233
        %v1235 = vpop.f32.mrf.mxu0
        %v1236 = vadd.f32 %v1182, %v1235
        %1237 = vdwg.mxu0
        %v1238 = vand.u32 %v1040, 4294901760
        %1239 = vmatpush.msra.mxu0 %v1238
        %v1240 = vand.u32 %v1038, 4294901760
        %1241 = vmatpush.msra.mxu0 %v1240
        %v1242 = vand.u32 %v1036, 4294901760
        %1243 = vmatpush.msra.mxu0 %v1242
        %v1244 = vand.u32 %v1034, 4294901760
        %1245 = vmatpush.msra.mxu0 %v1244
        %v1246 = vand.u32 %v1032, 4294901760
        %1247 = vmatpush.msra.mxu0 %v1246
        %v1248 = vand.u32 %v1030, 4294901760
        %1249 = vmatpush.msra.mxu0 %v1248
        %v1250 = vand.u32 %v1028, 4294901760
        %1251 = vmatpush.msra.mxu0 %v1250
        %v1252 = vand.u32 %v1026, 4294901760
        %1253 = vmatpush.msra.mxu0 %v1252
        %v1254 = vand.u32 %v1024, 4294901760
        %1255 = vmatpush.msra.mxu0 %v1254
        %v1256 = vand.u32 %v1022, 4294901760
        %1257 = vmatpush.msra.mxu0 %v1256
        %v1258 = vand.u32 %v1020, 4294901760
        %1259 = vmatpush.msra.mxu0 %v1258
        %v1260 = vand.u32 %v1018, 4294901760
        %1261 = vmatpush.msra.mxu0 %v1260
        %v1262 = vand.u32 %v1016, 4294901760
        %1263 = vmatpush.msra.mxu0 %v1262
        %v1264 = vand.u32 %v1014, 4294901760
        %1265 = vmatpush.msra.mxu0 %v1264
        %v1266 = vand.u32 %v1012, 4294901760
        %1267 = vmatpush.msra.mxu0 %v1266
        %v1268 = vand.u32 %v1010, 4294901760
        %1269 = vmatpush.msra.mxu0 %v1268
        %v1270 = vand.u32 %v1009, 4294901760
        %v1271 = vsub.f32 %v1009, %v1270
        %v1272 = vand.u32 %v1271, 4294901760
        %1273 = vmatmul.f32.gmra.mxu0 %v1272
        %v1274 = vpop.f32.mrf.mxu0
        %v1275 = vadd.f32 %v1236, %v1274
        %1276 = vdwg.mxu0
        %v1277 = vand.u32 %v1040, 4294901760
        %v1278 = vsub.f32 %v1040, %v1277
        %v1279 = vand.u32 %v1278, 4294901760
        %1280 = vmatpush.msra.mxu0 %v1279
        %v1281 = vand.u32 %v1038, 4294901760
        %v1282 = vsub.f32 %v1038, %v1281
        %v1283 = vand.u32 %v1282, 4294901760
        %1284 = vmatpush.msra.mxu0 %v1283
        %v1285 = vand.u32 %v1036, 4294901760
        %v1286 = vsub.f32 %v1036, %v1285
        %v1287 = vand.u32 %v1286, 4294901760
        %1288 = vmatpush.msra.mxu0 %v1287
        %v1289 = vand.u32 %v1034, 4294901760
        %v1290 = vsub.f32 %v1034, %v1289
        %v1291 = vand.u32 %v1290, 4294901760
        %1292 = vmatpush.msra.mxu0 %v1291
        %v1293 = vand.u32 %v1032, 4294901760
        %v1294 = vsub.f32 %v1032, %v1293
        %v1295 = vand.u32 %v1294, 4294901760
        %1296 = vmatpush.msra.mxu0 %v1295
        %v1297 = vand.u32 %v1030, 4294901760
        %v1298 = vsub.f32 %v1030, %v1297
        %v1299 = vand.u32 %v1298, 4294901760
        %1300 = vmatpush.msra.mxu0 %v1299
        %v1301 = vand.u32 %v1028, 4294901760
        %v1302 = vsub.f32 %v1028, %v1301
        %v1303 = vand.u32 %v1302, 4294901760
        %1304 = vmatpush.msra.mxu0 %v1303
        %v1305 = vand.u32 %v1026, 4294901760
        %v1306 = vsub.f32 %v1026, %v1305
        %v1307 = vand.u32 %v1306, 4294901760
        %1308 = vmatpush.msra.mxu0 %v1307
        %v1309 = vand.u32 %v1024, 4294901760
        %v1310 = vsub.f32 %v1024, %v1309
        %v1311 = vand.u32 %v1310, 4294901760
        %1312 = vmatpush.msra.mxu0 %v1311
        %v1313 = vand.u32 %v1022, 4294901760
        %v1314 = vsub.f32 %v1022, %v1313
        %v1315 = vand.u32 %v1314, 4294901760
        %1316 = vmatpush.msra.mxu0 %v1315
        %v1317 = vand.u32 %v1020, 4294901760
        %v1318 = vsub.f32 %v1020, %v1317
        %v1319 = vand.u32 %v1318, 4294901760
        %1320 = vmatpush.msra.mxu0 %v1319
        %v1321 = vand.u32 %v1018, 4294901760
        %v1322 = vsub.f32 %v1018, %v1321
        %v1323 = vand.u32 %v1322, 4294901760
        %1324 = vmatpush.msra.mxu0 %v1323
        %v1325 = vand.u32 %v1016, 4294901760
        %v1326 = vsub.f32 %v1016, %v1325
        %v1327 = vand.u32 %v1326, 4294901760
        %1328 = vmatpush.msra.mxu0 %v1327
        %v1329 = vand.u32 %v1014, 4294901760
        %v1330 = vsub.f32 %v1014, %v1329
        %v1331 = vand.u32 %v1330, 4294901760
        %1332 = vmatpush.msra.mxu0 %v1331
        %v1333 = vand.u32 %v1012, 4294901760
        %v1334 = vsub.f32 %v1012, %v1333
        %v1335 = vand.u32 %v1334, 4294901760
        %1336 = vmatpush.msra.mxu0 %v1335
        %v1337 = vand.u32 %v1010, 4294901760
        %v1338 = vsub.f32 %v1010, %v1337
        %v1339 = vand.u32 %v1338, 4294901760
        %1340 = vmatpush.msra.mxu0 %v1339
        %v1341 = vand.u32 %v1009, 4294901760
        %1342 = vmatmul.f32.gmra.mxu0 %v1341
        %v1343 = vpop.f32.mrf.mxu0
        %v1344 = vadd.f32 %v1275, %v1343
        %1345 = vdwg.mxu0
        %v1346 = vand.u32 %v1040, 4294901760
        %1347 = vmatpush.msra.mxu0 %v1346
        %v1348 = vand.u32 %v1038, 4294901760
        %1349 = vmatpush.msra.mxu0 %v1348
        %v1350 = vand.u32 %v1036, 4294901760
        %1351 = vmatpush.msra.mxu0 %v1350
        %v1352 = vand.u32 %v1034, 4294901760
        %1353 = vmatpush.msra.mxu0 %v1352
        %v1354 = vand.u32 %v1032, 4294901760
        %1355 = vmatpush.msra.mxu0 %v1354
        %v1356 = vand.u32 %v1030, 4294901760
        %1357 = vmatpush.msra.mxu0 %v1356
        %v1358 = vand.u32 %v1028, 4294901760
        %1359 = vmatpush.msra.mxu0 %v1358
        %v1360 = vand.u32 %v1026, 4294901760
        %1361 = vmatpush.msra.mxu0 %v1360
        %v1362 = vand.u32 %v1024, 4294901760
        %1363 = vmatpush.msra.mxu0 %v1362
        %v1364 = vand.u32 %v1022, 4294901760
        %1365 = vmatpush.msra.mxu0 %v1364
        %v1366 = vand.u32 %v1020, 4294901760
        %1367 = vmatpush.msra.mxu0 %v1366
        %v1368 = vand.u32 %v1018, 4294901760
        %1369 = vmatpush.msra.mxu0 %v1368
        %v1370 = vand.u32 %v1016, 4294901760
        %1371 = vmatpush.msra.mxu0 %v1370
        %v1372 = vand.u32 %v1014, 4294901760
        %1373 = vmatpush.msra.mxu0 %v1372
        %v1374 = vand.u32 %v1012, 4294901760
        %1375 = vmatpush.msra.mxu0 %v1374
        %v1376 = vand.u32 %v1010, 4294901760
        %1377 = vmatpush.msra.mxu0 %v1376
        %v1378 = vand.u32 %v1009, 4294901760
        %1379 = vmatmul.f32.gmra.mxu0 %v1378
        %v1380 = vpop.f32.mrf.mxu0
        %v1381 = vadd.f32 %v1344, %v1380
        %1382 = vdwg.mxu0
        %v1383 = vand.u32 %v1041, 4294901760
        %1384 = vmatpush.msra.mxu0 %v1383
        %v1385 = vand.u32 %v1039, 4294901760
        %1386 = vmatpush.msra.mxu0 %v1385
        %v1387 = vand.u32 %v1037, 4294901760
        %1388 = vmatpush.msra.mxu0 %v1387
        %v1389 = vand.u32 %v1035, 4294901760
        %1390 = vmatpush.msra.mxu0 %v1389
        %v1391 = vand.u32 %v1033, 4294901760
        %1392 = vmatpush.msra.mxu0 %v1391
        %v1393 = vand.u32 %v1031, 4294901760
        %1394 = vmatpush.msra.mxu0 %v1393
        %v1395 = vand.u32 %v1029, 4294901760
        %1396 = vmatpush.msra.mxu0 %v1395
        %v1397 = vand.u32 %v1027, 4294901760
        %1398 = vmatpush.msra.mxu0 %v1397
        %v1399 = vand.u32 %v1025, 4294901760
        %1400 = vmatpush.msra.mxu0 %v1399
        %v1401 = vand.u32 %v1023, 4294901760
        %1402 = vmatpush.msra.mxu0 %v1401
        %v1403 = vand.u32 %v1021, 4294901760
        %1404 = vmatpush.msra.mxu0 %v1403
        %v1405 = vand.u32 %v1019, 4294901760
        %1406 = vmatpush.msra.mxu0 %v1405
        %v1407 = vand.u32 %v1017, 4294901760
        %1408 = vmatpush.msra.mxu0 %v1407
        %v1409 = vand.u32 %v1015, 4294901760
        %1410 = vmatpush.msra.mxu0 %v1409
        %v1411 = vand.u32 %v1013, 4294901760
        %1412 = vmatpush.msra.mxu0 %v1411
        %v1413 = vand.u32 %v1011, 4294901760
        %1414 = vmatpush.msra.mxu0 %v1413
        %v1415 = vand.u32 %v1009, 4294901760
        %v1416 = vsub.f32 %v1009, %v1415
        %v1417 = vand.u32 %v1416, 4294901760
        %v1418 = vsub.f32 %v1416, %v1417
        %v1419 = vand.u32 %v1418, 4294901760
        %1420 = vmatmul.f32.gmra.mxu0 %v1419
        %v1421 = vpop.f32.mrf.mxu0
        %v1422 = vadd.f32 0.0, %v1421
        %1423 = vdwg.mxu0
        %v1424 = vand.u32 %v1041, 4294901760
        %v1425 = vsub.f32 %v1041, %v1424
        %v1426 = vand.u32 %v1425, 4294901760
        %v1427 = vsub.f32 %v1425, %v1426
        %v1428 = vand.u32 %v1427, 4294901760
        %1429 = vmatpush.msra.mxu0 %v1428
        %v1430 = vand.u32 %v1039, 4294901760
        %v1431 = vsub.f32 %v1039, %v1430
        %v1432 = vand.u32 %v1431, 4294901760
        %v1433 = vsub.f32 %v1431, %v1432
        %v1434 = vand.u32 %v1433, 4294901760
        %1435 = vmatpush.msra.mxu0 %v1434
        %v1436 = vand.u32 %v1037, 4294901760
        %v1437 = vsub.f32 %v1037, %v1436
        %v1438 = vand.u32 %v1437, 4294901760
        %v1439 = vsub.f32 %v1437, %v1438
        %v1440 = vand.u32 %v1439, 4294901760
        %1441 = vmatpush.msra.mxu0 %v1440
        %v1442 = vand.u32 %v1035, 4294901760
        %v1443 = vsub.f32 %v1035, %v1442
        %v1444 = vand.u32 %v1443, 4294901760
        %v1445 = vsub.f32 %v1443, %v1444
        %v1446 = vand.u32 %v1445, 4294901760
        %1447 = vmatpush.msra.mxu0 %v1446
        %v1448 = vand.u32 %v1033, 4294901760
        %v1449 = vsub.f32 %v1033, %v1448
        %v1450 = vand.u32 %v1449, 4294901760
        %v1451 = vsub.f32 %v1449, %v1450
        %v1452 = vand.u32 %v1451, 4294901760
        %1453 = vmatpush.msra.mxu0 %v1452
        %v1454 = vand.u32 %v1031, 4294901760
        %v1455 = vsub.f32 %v1031, %v1454
        %v1456 = vand.u32 %v1455, 4294901760
        %v1457 = vsub.f32 %v1455, %v1456
        %v1458 = vand.u32 %v1457, 4294901760
        %1459 = vmatpush.msra.mxu0 %v1458
        %v1460 = vand.u32 %v1029, 4294901760
        %v1461 = vsub.f32 %v1029, %v1460
        %v1462 = vand.u32 %v1461, 4294901760
        %v1463 = vsub.f32 %v1461, %v1462
        %v1464 = vand.u32 %v1463, 4294901760
        %1465 = vmatpush.msra.mxu0 %v1464
        %v1466 = vand.u32 %v1027, 4294901760
        %v1467 = vsub.f32 %v1027, %v1466
        %v1468 = vand.u32 %v1467, 4294901760
        %v1469 = vsub.f32 %v1467, %v1468
        %v1470 = vand.u32 %v1469, 4294901760
        %1471 = vmatpush.msra.mxu0 %v1470
        %v1472 = vand.u32 %v1025, 4294901760
        %v1473 = vsub.f32 %v1025, %v1472
        %v1474 = vand.u32 %v1473, 4294901760
        %v1475 = vsub.f32 %v1473, %v1474
        %v1476 = vand.u32 %v1475, 4294901760
        %1477 = vmatpush.msra.mxu0 %v1476
        %v1478 = vand.u32 %v1023, 4294901760
        %v1479 = vsub.f32 %v1023, %v1478
        %v1480 = vand.u32 %v1479, 4294901760
        %v1481 = vsub.f32 %v1479, %v1480
        %v1482 = vand.u32 %v1481, 4294901760
        %1483 = vmatpush.msra.mxu0 %v1482
        %v1484 = vand.u32 %v1021, 4294901760
        %v1485 = vsub.f32 %v1021, %v1484
        %v1486 = vand.u32 %v1485, 4294901760
        %v1487 = vsub.f32 %v1485, %v1486
        %v1488 = vand.u32 %v1487, 4294901760
        %1489 = vmatpush.msra.mxu0 %v1488
        %v1490 = vand.u32 %v1019, 4294901760
        %v1491 = vsub.f32 %v1019, %v1490
        %v1492 = vand.u32 %v1491, 4294901760
        %v1493 = vsub.f32 %v1491, %v1492
        %v1494 = vand.u32 %v1493, 4294901760
        %1495 = vmatpush.msra.mxu0 %v1494
        %v1496 = vand.u32 %v1017, 4294901760
        %v1497 = vsub.f32 %v1017, %v1496
        %v1498 = vand.u32 %v1497, 4294901760
        %v1499 = vsub.f32 %v1497, %v1498
        %v1500 = vand.u32 %v1499, 4294901760
        %1501 = vmatpush.msra.mxu0 %v1500
        %v1502 = vand.u32 %v1015, 4294901760
        %v1503 = vsub.f32 %v1015, %v1502
        %v1504 = vand.u32 %v1503, 4294901760
        %v1505 = vsub.f32 %v1503, %v1504
        %v1506 = vand.u32 %v1505, 4294901760
        %1507 = vmatpush.msra.mxu0 %v1506
        %v1508 = vand.u32 %v1013, 4294901760
        %v1509 = vsub.f32 %v1013, %v1508
        %v1510 = vand.u32 %v1509, 4294901760
        %v1511 = vsub.f32 %v1509, %v1510
        %v1512 = vand.u32 %v1511, 4294901760
        %1513 = vmatpush.msra.mxu0 %v1512
        %v1514 = vand.u32 %v1011, 4294901760
        %v1515 = vsub.f32 %v1011, %v1514
        %v1516 = vand.u32 %v1515, 4294901760
        %v1517 = vsub.f32 %v1515, %v1516
        %v1518 = vand.u32 %v1517, 4294901760
        %1519 = vmatpush.msra.mxu0 %v1518
        %v1520 = vand.u32 %v1009, 4294901760
        %1521 = vmatmul.f32.gmra.mxu0 %v1520
        %v1522 = vpop.f32.mrf.mxu0
        %v1523 = vadd.f32 %v1422, %v1522
        %1524 = vdwg.mxu0
        %v1525 = vand.u32 %v1041, 4294901760
        %v1526 = vsub.f32 %v1041, %v1525
        %1527 = vmatpush.msra.mxu0 %v1526
        %v1528 = vand.u32 %v1039, 4294901760
        %v1529 = vsub.f32 %v1039, %v1528
        %1530 = vmatpush.msra.mxu0 %v1529
        %v1531 = vand.u32 %v1037, 4294901760
        %v1532 = vsub.f32 %v1037, %v1531
        %1533 = vmatpush.msra.mxu0 %v1532
        %v1534 = vand.u32 %v1035, 4294901760
        %v1535 = vsub.f32 %v1035, %v1534
        %1536 = vmatpush.msra.mxu0 %v1535
        %v1537 = vand.u32 %v1033, 4294901760
        %v1538 = vsub.f32 %v1033, %v1537
        %1539 = vmatpush.msra.mxu0 %v1538
        %v1540 = vand.u32 %v1031, 4294901760
        %v1541 = vsub.f32 %v1031, %v1540
        %1542 = vmatpush.msra.mxu0 %v1541
        %v1543 = vand.u32 %v1029, 4294901760
        %v1544 = vsub.f32 %v1029, %v1543
        %1545 = vmatpush.msra.mxu0 %v1544
        %v1546 = vand.u32 %v1027, 4294901760
        %v1547 = vsub.f32 %v1027, %v1546
        %1548 = vmatpush.msra.mxu0 %v1547
        %v1549 = vand.u32 %v1025, 4294901760
        %v1550 = vsub.f32 %v1025, %v1549
        %1551 = vmatpush.msra.mxu0 %v1550
        %v1552 = vand.u32 %v1023, 4294901760
        %v1553 = vsub.f32 %v1023, %v1552
        %1554 = vmatpush.msra.mxu0 %v1553
        %v1555 = vand.u32 %v1021, 4294901760
        %v1556 = vsub.f32 %v1021, %v1555
        %1557 = vmatpush.msra.mxu0 %v1556
        %v1558 = vand.u32 %v1019, 4294901760
        %v1559 = vsub.f32 %v1019, %v1558
        %1560 = vmatpush.msra.mxu0 %v1559
        %v1561 = vand.u32 %v1017, 4294901760
        %v1562 = vsub.f32 %v1017, %v1561
        %1563 = vmatpush.msra.mxu0 %v1562
        %v1564 = vand.u32 %v1015, 4294901760
        %v1565 = vsub.f32 %v1015, %v1564
        %1566 = vmatpush.msra.mxu0 %v1565
        %v1567 = vand.u32 %v1013, 4294901760
        %v1568 = vsub.f32 %v1013, %v1567
        %1569 = vmatpush.msra.mxu0 %v1568
        %v1570 = vand.u32 %v1011, 4294901760
        %v1571 = vsub.f32 %v1011, %v1570
        %1572 = vmatpush.msra.mxu0 %v1571
        %v1573 = vand.u32 %v1009, 4294901760
        %v1574 = vsub.f32 %v1009, %v1573
        %1575 = vmatmul.f32.gmra.mxu0 %v1574
        %v1576 = vpop.f32.mrf.mxu0
        %v1577 = vadd.f32 %v1523, %v1576
        %1578 = vdwg.mxu0
        %v1579 = vand.u32 %v1041, 4294901760
        %1580 = vmatpush.msra.mxu0 %v1579
        %v1581 = vand.u32 %v1039, 4294901760
        %1582 = vmatpush.msra.mxu0 %v1581
        %v1583 = vand.u32 %v1037, 4294901760
        %1584 = vmatpush.msra.mxu0 %v1583
        %v1585 = vand.u32 %v1035, 4294901760
        %1586 = vmatpush.msra.mxu0 %v1585
        %v1587 = vand.u32 %v1033, 4294901760
        %1588 = vmatpush.msra.mxu0 %v1587
        %v1589 = vand.u32 %v1031, 4294901760
        %1590 = vmatpush.msra.mxu0 %v1589
        %v1591 = vand.u32 %v1029, 4294901760
        %1592 = vmatpush.msra.mxu0 %v1591
        %v1593 = vand.u32 %v1027, 4294901760
        %1594 = vmatpush.msra.mxu0 %v1593
        %v1595 = vand.u32 %v1025, 4294901760
        %1596 = vmatpush.msra.mxu0 %v1595
        %v1597 = vand.u32 %v1023, 4294901760
        %1598 = vmatpush.msra.mxu0 %v1597
        %v1599 = vand.u32 %v1021, 4294901760
        %1600 = vmatpush.msra.mxu0 %v1599
        %v1601 = vand.u32 %v1019, 4294901760
        %1602 = vmatpush.msra.mxu0 %v1601
        %v1603 = vand.u32 %v1017, 4294901760
        %1604 = vmatpush.msra.mxu0 %v1603
        %v1605 = vand.u32 %v1015, 4294901760
        %1606 = vmatpush.msra.mxu0 %v1605
        %v1607 = vand.u32 %v1013, 4294901760
        %1608 = vmatpush.msra.mxu0 %v1607
        %v1609 = vand.u32 %v1011, 4294901760
        %1610 = vmatpush.msra.mxu0 %v1609
        %v1611 = vand.u32 %v1009, 4294901760
        %v1612 = vsub.f32 %v1009, %v1611
        %v1613 = vand.u32 %v1612, 4294901760
        %1614 = vmatmul.f32.gmra.mxu0 %v1613
        %v1615 = vpop.f32.mrf.mxu0
        %v1616 = vadd.f32 %v1577, %v1615
        %1617 = vdwg.mxu0
        %v1618 = vand.u32 %v1041, 4294901760
        %v1619 = vsub.f32 %v1041, %v1618
        %v1620 = vand.u32 %v1619, 4294901760
        %1621 = vmatpush.msra.mxu0 %v1620
        %v1622 = vand.u32 %v1039, 4294901760
        %v1623 = vsub.f32 %v1039, %v1622
        %v1624 = vand.u32 %v1623, 4294901760
        %1625 = vmatpush.msra.mxu0 %v1624
        %v1626 = vand.u32 %v1037, 4294901760
        %v1627 = vsub.f32 %v1037, %v1626
        %v1628 = vand.u32 %v1627, 4294901760
        %1629 = vmatpush.msra.mxu0 %v1628
        %v1630 = vand.u32 %v1035, 4294901760
        %v1631 = vsub.f32 %v1035, %v1630
        %v1632 = vand.u32 %v1631, 4294901760
        %1633 = vmatpush.msra.mxu0 %v1632
        %v1634 = vand.u32 %v1033, 4294901760
        %v1635 = vsub.f32 %v1033, %v1634
        %v1636 = vand.u32 %v1635, 4294901760
        %1637 = vmatpush.msra.mxu0 %v1636
        %v1638 = vand.u32 %v1031, 4294901760
        %v1639 = vsub.f32 %v1031, %v1638
        %v1640 = vand.u32 %v1639, 4294901760
        %1641 = vmatpush.msra.mxu0 %v1640
        %v1642 = vand.u32 %v1029, 4294901760
        %v1643 = vsub.f32 %v1029, %v1642
        %v1644 = vand.u32 %v1643, 4294901760
        %1645 = vmatpush.msra.mxu0 %v1644
        %v1646 = vand.u32 %v1027, 4294901760
        %v1647 = vsub.f32 %v1027, %v1646
        %v1648 = vand.u32 %v1647, 4294901760
        %1649 = vmatpush.msra.mxu0 %v1648
        %v1650 = vand.u32 %v1025, 4294901760
        %v1651 = vsub.f32 %v1025, %v1650
        %v1652 = vand.u32 %v1651, 4294901760
        %1653 = vmatpush.msra.mxu0 %v1652
        %v1654 = vand.u32 %v1023, 4294901760
        %v1655 = vsub.f32 %v1023, %v1654
        %v1656 = vand.u32 %v1655, 4294901760
        %1657 = vmatpush.msra.mxu0 %v1656
        %v1658 = vand.u32 %v1021, 4294901760
        %v1659 = vsub.f32 %v1021, %v1658
        %v1660 = vand.u32 %v1659, 4294901760
        %1661 = vmatpush.msra.mxu0 %v1660
        %v1662 = vand.u32 %v1019, 4294901760
        %v1663 = vsub.f32 %v1019, %v1662
        %v1664 = vand.u32 %v1663, 4294901760
        %1665 = vmatpush.msra.mxu0 %v1664
        %v1666 = vand.u32 %v1017, 4294901760
        %v1667 = vsub.f32 %v1017, %v1666
        %v1668 = vand.u32 %v1667, 4294901760
        %1669 = vmatpush.msra.mxu0 %v1668
        %v1670 = vand.u32 %v1015, 4294901760
        %v1671 = vsub.f32 %v1015, %v1670
        %v1672 = vand.u32 %v1671, 4294901760
        %1673 = vmatpush.msra.mxu0 %v1672
        %v1674 = vand.u32 %v1013, 4294901760
        %v1675 = vsub.f32 %v1013, %v1674
        %v1676 = vand.u32 %v1675, 4294901760
        %1677 = vmatpush.msra.mxu0 %v1676
        %v1678 = vand.u32 %v1011, 4294901760
        %v1679 = vsub.f32 %v1011, %v1678
        %v1680 = vand.u32 %v1679, 4294901760
        %1681 = vmatpush.msra.mxu0 %v1680
        %v1682 = vand.u32 %v1009, 4294901760
        %1683 = vmatmul.f32.gmra.mxu0 %v1682
        %v1684 = vpop.f32.mrf.mxu0
        %v1685 = vadd.f32 %v1616, %v1684
        %1686 = vdwg.mxu0
        %v1687 = vand.u32 %v1041, 4294901760
        %1688 = vmatpush.msra.mxu0 %v1687
        %v1689 = vand.u32 %v1039, 4294901760
        %1690 = vmatpush.msra.mxu0 %v1689
        %v1691 = vand.u32 %v1037, 4294901760
        %1692 = vmatpush.msra.mxu0 %v1691
        %v1693 = vand.u32 %v1035, 4294901760
        %1694 = vmatpush.msra.mxu0 %v1693
        %v1695 = vand.u32 %v1033, 4294901760
        %1696 = vmatpush.msra.mxu0 %v1695
        %v1697 = vand.u32 %v1031, 4294901760
        %1698 = vmatpush.msra.mxu0 %v1697
        %v1699 = vand.u32 %v1029, 4294901760
        %1700 = vmatpush.msra.mxu0 %v1699
        %v1701 = vand.u32 %v1027, 4294901760
        %1702 = vmatpush.msra.mxu0 %v1701
        %v1703 = vand.u32 %v1025, 4294901760
        %1704 = vmatpush.msra.mxu0 %v1703
        %v1705 = vand.u32 %v1023, 4294901760
        %1706 = vmatpush.msra.mxu0 %v1705
        %v1707 = vand.u32 %v1021, 4294901760
        %1708 = vmatpush.msra.mxu0 %v1707
        %v1709 = vand.u32 %v1019, 4294901760
        %1710 = vmatpush.msra.mxu0 %v1709
        %v1711 = vand.u32 %v1017, 4294901760
        %1712 = vmatpush.msra.mxu0 %v1711
        %v1713 = vand.u32 %v1015, 4294901760
        %1714 = vmatpush.msra.mxu0 %v1713
        %v1715 = vand.u32 %v1013, 4294901760
        %1716 = vmatpush.msra.mxu0 %v1715
        %v1717 = vand.u32 %v1011, 4294901760
        %1718 = vmatpush.msra.mxu0 %v1717
        %v1719 = vand.u32 %v1009, 4294901760
        %1720 = vmatmul.f32.gmra.mxu0 %v1719
        %v1721 = vpop.f32.mrf.mxu0
        %v1722 = vadd.f32 %v1685, %v1721
        %1723 = vdwg.mxu0
        %v1726 = vrot.slane %v1722, 4
        %vm1727 = vcmask 1043456
        %v1728 = vsel %vm1727, %v1381, %v1726
        %1730 = vst [vmem:[%s265] sm:$0xff] %v1728
        %s1731 = sand.u32 %s120, 1
        %s1732 = scalar_lea.sflag [#allocation5], %s1731
        %s1733 = sand.u32 %s120, 1
        %s1734 = smul.addr %s1733, 8
        %s1735 = scalar_lea.vmem [#allocation11], %s1734
        // Predicated region
        $region53: #{tpu_custom_call.1} parent=35 // pred_check
          %p1736 = pneg %p130
        $region54: #{tpu_custom_call.1} parent=35 // pred_check_branch
          %1738 = sbr.rel (%p1736) target = $region56
        $region55: #{tpu_custom_call.1} parent=35 // pred_region
          %1740 = vsyncadd %s1732, 0
          %s1741 = smul.addr %s23, 2
          %s1742 = smul.addr %s1741, 4
          %s1743 = scalar_lea.hbm %s4, %s1742
          %s1745 = sshll.u32 %s1735, 4
          %s1746 = int_to_ptr.vmem [resolvable:$true] %s1745
          %s1747 = sshll.u32 %s1743, 4
          %s1748 = int_to_ptr.hbm [resolvable:$true] %s1747
          %1750 = dma.vmem_to_hbm [thread:$0]  %s1746, 128, %s1748, %s1732
        $region56: #{tpu_custom_call.1} parent=35 // pred_fallthru
          _
      $region36: #{tpu_custom_call.1} parent=5 // pred_fallthru
        _
      %p1751 = scmp.le.s32.totalorder 2, %s18
      // Predicated region
      $region57: #{tpu_custom_call.1} parent=5 // pred_check
        %p1752 = pneg %p1751
      $region58: #{tpu_custom_call.1} parent=5 // pred_check_branch
        %1754 = sbr.rel (%p1752) target = $region60
      $region59: #{tpu_custom_call.1} parent=5 // pred_region
        %s1755 = ssub.s32 %s18, 2
        // Predicated region
        $region61: #{tpu_custom_call.1} parent=59 // pred_check
          %p1756 = pneg %p136
        $region62: #{tpu_custom_call.1} parent=59 // pred_check_branch
          %1758 = sbr.rel (%p1756) target = $region64
        $region63: #{tpu_custom_call.1} parent=59 // pred_region
          %s1759 = sand.u32 %s121, 1
          %s1760 = scalar_lea.sflag [#allocation5], %s1759
          %s1761 = sand.u32 %s121, 1
          %s1762 = smul.addr %s1761, 8
          %s1763 = scalar_lea.vmem [#allocation11], %s1762
          %1765 = dma.done %s1760, 128
        $region64: #{tpu_custom_call.1} parent=59 // pred_fallthru
          _
      $region60: #{tpu_custom_call.1} parent=5 // pred_fallthru
        _
    $region6: #{tpu_custom_call.1} parent=1 // loop_footer
      %s22 = sadd.s32 1, %s18
    $region7: #{tpu_custom_call.1} parent=1 // loop_footer_branch
      %17 = sbr.rel target = $region3
    $region8: #{tpu_custom_call.1} parent=1 // loop_exit
      _
    %1766 = vsyncpa [#allocation4], 1
    %s1767 = scalar_lea.sflag [#allocation4], 1
    %1768 = vsyncpa %s1767, 1
    %1769 = vsyncpa [#allocation7], 1
    %1770 = vsyncpa [#allocation10], 1
    %1771 = vsyncpa [#allocation5], 1
    %s1772 = scalar_lea.sflag [#allocation5], 1
    %1773 = vsyncpa %s1772, 1

</llo_original>
